<compile_context>
chip_gen: v7x
topology: tpu7x:2x2x1
jax: 0.10.0
libtpu: 0.0.40
codegen_flags: <defaults>
</compile_context>

<pallas_src>
import functools

import numpy as np

import jax
import jax.numpy as jnp
from jax import lax
from jax.experimental import pallas as pl
from jax.experimental.pallas import tpu as pltpu


def _round_up(a, b):
    return (a + b - 1) // b * b


def _vmem_capacity_bytes():
    try:
        return int(pltpu.get_tpu_info().vmem_capacity_bytes)
    except Exception:
        return 64 * 1024 * 1024  # conservative fallback (v7x per-core physical VMEM)


# ----------------------------- fused Pallas kernel ------------------------------


def _fused_conv_bn_kernel(x_ref, w_ref, g_ref, b_ref, mask_ref, o_ref,
                          stash_ref, rmean_ref, rm2_ref, rcnt_ref,
                          scale_ref, shift_ref, *, tap_offsets, inv_m, eps):
    """Fused conv (shifted-tap matmuls) + BatchNorm with streaming batch statistics.

    Grid: (cout_blocks [parallel], pass [0=conv+stats, 1=normalize], m_tiles).

    x_ref    : (Cin, tile_m + halo)       bf16  flat padded-grid input tile + halo
    w_ref    : (kh*kw, tile_cout, Cin)    bf16  per-tap conv weights
    g_ref    : (tile_cout, 1)             f32   BN gamma
    b_ref    : (tile_cout, 1)             f32   BN beta
    mask_ref : (1, tile_m)                f32   1.0 at valid (non-padding) positions
    o_ref    : (tile_cout, tile_m)        f32   streamed output block (written in pass 1)
    stash    : (n_tiles, tile_cout, tile_m) f32 conv output, resident across the grid
    rmean/rm2/rcnt : running per-channel mean / M2 / count (Chan combine)
    scale/shift    : finalized per-channel affine
    """
    p = pl.program_id(1)     # 0: conv + streaming stats,  1: normalize + store
    mi = pl.program_id(2)    # flat spatial tile index
    tile_cout = o_ref.shape[0]
    tile_m = o_ref.shape[1]

    @pl.when((p == 0) & (mi == 0))
    def _init_stats():
        rmean_ref[...] = jnp.zeros_like(rmean_ref)
        rm2_ref[...] = jnp.zeros_like(rm2_ref)
        rcnt_ref[...] = jnp.zeros_like(rcnt_ref)

    @pl.when(p == 0)
    def _conv_and_stats():
        big = x_ref[...]                                   # (Cin, tile_m + halo)
        # kh*kw shifted MXU matmuls, contracting only over Cin (in-VMEM "im2col").
        off0 = tap_offsets[0]
        acc = jnp.dot(w_ref[0], big[:, off0:off0 + tile_m],
                      preferred_element_type=jnp.float32)
        for t in range(1, len(tap_offsets)):
            off = tap_offsets[t]
            acc = acc + jnp.dot(w_ref[t], big[:, off:off + tile_m],
                                preferred_element_type=jnp.float32)
        stash_ref[mi] = acc                                # stays in VMEM until pass 1

        # Streaming per-channel statistics (Chan-style combine; padding masked out).
        msk = mask_ref[...]                                # (1, tile_m) in {0,1}
        cnt = jnp.sum(msk, axis=1, keepdims=True)          # (1, 1)
        tsum = jnp.sum(acc * msk, axis=1, keepdims=True)   # (tile_cout, 1)
        tmean = tsum / jnp.maximum(cnt, 1.0)
        d = (acc - tmean) * msk
        tm2 = jnp.sum(d * d, axis=1, keepdims=True)        # (tile_cout, 1)

        rc = rcnt_ref[...]                                 # (1, 1)
        tot = rc + cnt
        w_new = cnt / jnp.maximum(tot, 1.0)
        delta = tmean - rmean_ref[...]
        rmean_ref[...] = rmean_ref[...] + delta * w_new
        rm2_ref[...] = rm2_ref[...] + tm2 + (delta * delta) * (rc * w_new)
        rcnt_ref[...] = tot

    @pl.when((p == 1) & (mi == 0))
    def _finalize_stats():
        var = rm2_ref[...] * inv_m                         # biased batch variance
        sc = g_ref[...] * lax.rsqrt(var + eps)
        scale_ref[...] = sc
        shift_ref[...] = b_ref[...] - rmean_ref[...] * sc

    @pl.when(p == 1)
    def _normalize_and_store():
        o_ref[...] = (stash_ref[mi] * scale_ref[...]
                      + shift_ref[...]).astype(o_ref.dtype)


# ------------------------------ host wrapper --------------------------------


@functools.partial(jax.jit, static_argnames=("padding", "eps", "tile_m", "tile_cout"))
def conv_bn_forward(x, weight, gamma, beta, *, padding=1, eps=1e-5,
                    tile_m=None, tile_cout=None):
    """Conv2d(bias=False, stride=1, dilation=1, groups=1) + BatchNorm2d (train stats)."""
    n, cin, h, w = x.shape
    cout, cin_w, kh, kw = weight.shape
    assert cin_w == cin, "groups != 1 not supported"
    hp, wp = h + 2 * padding, w + 2 * padding
    h_out, w_out = hp - kh + 1, wp - kw + 1
    assert h_out > 0 and w_out > 0
    mp = n * hp * wp                     # conv is evaluated on the full padded grid
    m_valid = n * h_out * w_out          # elements that feed the batch statistics
    max_off = (kh - 1) * wp + (kw - 1)   # largest flat tap shift
    halo = _round_up(max_off, 128) if max_off else 0

    if tile_m is None:
        tile_m = min(2048, _round_up(mp, 128))
    tile_m = min(tile_m, _round_up(mp, 128))
    assert tile_m % 128 == 0, "tile_m must be a multiple of 128"
    mp_round = _round_up(mp, tile_m)
    n_tiles = mp_round // tile_m

    if tile_cout is None:
        tile_cout = cout
        if cout > 256:
            for cand in (256, 128, 64, 32, 16, 8):
                if cout % cand == 0:
                    tile_cout = cand
                    break
    assert cout % tile_cout == 0 and (tile_cout == cout or tile_cout % 8 == 0)
    n_co = cout // tile_cout

    # --- generation-aware VMEM budget --------------------------------------
    blk_w = tile_m + halo
    need = (2 * cin * blk_w * 2                       # double-buffered input tile (bf16)
            + 2 * kh * kw * tile_cout * cin * 2       # weight (double-buffered)
            + 2 * tile_m * 4                          # mask
            + n_tiles * tile_cout * tile_m * 4        # resident conv-output stash
            + 2 * tile_cout * tile_m * 4              # streamed output block
            + 8 * tile_cout * 128 * 4                 # small per-channel scratches
            + (1 << 20))                              # headroom
    cap = _vmem_capacity_bytes()
    assert need <= int(cap * 0.8), (
        f"fused-BN conv stash does not fit VMEM ({need} B of {cap} B); lower tile_cout "
        "or use a two-kernel (stats / apply) variant for this shape")
    vmem_limit = int(min(cap * 7 // 8, max(2 * need, 32 << 20)))

    # --- host prep: pad once + per-tile halo duplication (no kh*kw im2col) --
    xpad = jnp.pad(x, ((0, 0), (0, 0), (padding, padding), (padding, padding)))
    xflat = jnp.transpose(xpad, (1, 0, 2, 3)).reshape(cin, mp)
    xflat = jnp.pad(xflat, ((0, 0), (0, mp_round + halo - mp))).astype(jnp.bfloat16)
    # Each tile's block carries its own trailing halo so the kernel only needs
    # STATIC lane shifts (no dynamic / unaligned ref slicing).
    xprep = jnp.concatenate(
        [xflat[:, i * tile_m: i * tile_m + blk_w] for i in range(n_tiles)], axis=1)

    # Weight as (kh*kw, Cout, Cin); tap t = ky*kw + kx  <->  flat shift ky*wp + kx.
    w_taps = jnp.transpose(weight, (2, 3, 0, 1)).reshape(kh * kw, cout, cin)
    w_taps = w_taps.astype(jnp.bfloat16)
    tap_offsets = tuple(ky * wp + kx for ky in range(kh) for kx in range(kw))

    # Static validity mask over the padded output grid (excludes pad positions).
    m_idx = np.arange(mp_round)
    valid = (m_idx < mp) & (m_idx % wp < w_out) & ((m_idx // wp) % hp < h_out)
    mask = jnp.asarray(valid.astype(np.float32)).reshape(1, mp_round)

    g2 = gamma.reshape(cout, 1).astype(jnp.float32)
    b2 = beta.reshape(cout, 1).astype(jnp.float32)

    kernel = functools.partial(_fused_conv_bn_kernel, tap_offsets=tap_offsets,
                               inv_m=1.0 / float(m_valid), eps=float(eps))

    out = pl.pallas_call(
        kernel,
        out_shape=jax.ShapeDtypeStruct((cout, mp_round), jnp.float32),
        grid_spec=pltpu.PrefetchScalarGridSpec(
            num_scalar_prefetch=0,
            grid=(n_co, 2, n_tiles),
            in_specs=[
                # streamed halo'd input tile; held at block 0 during pass 1 (no refetch)
                pl.BlockSpec((cin, blk_w), lambda co, p, mi: (0, mi * (1 - p))),
                pl.BlockSpec((kh * kw, tile_cout, cin), lambda co, p, mi: (0, co, 0)),
                pl.BlockSpec((tile_cout, 1), lambda co, p, mi: (co, 0)),   # gamma
                pl.BlockSpec((tile_cout, 1), lambda co, p, mi: (co, 0)),   # beta
                pl.BlockSpec((1, tile_m), lambda co, p, mi: (0, mi * (1 - p))),  # mask
            ],
            out_specs=pl.BlockSpec((tile_cout, tile_m),
                                   lambda co, p, mi: (co, p * mi)),
            scratch_shapes=[
                pltpu.VMEM((n_tiles, tile_cout, tile_m), jnp.float32),  # conv stash
                pltpu.VMEM((tile_cout, 1), jnp.float32),                # running mean
                pltpu.VMEM((tile_cout, 1), jnp.float32),                # running M2
                pltpu.VMEM((1, 1), jnp.float32),                        # running count
                pltpu.VMEM((tile_cout, 1), jnp.float32),                # scale
                pltpu.VMEM((tile_cout, 1), jnp.float32),                # shift
            ]),
        compiler_params=pltpu.CompilerParams(
            dimension_semantics=("parallel", "arbitrary", "arbitrary"),
            vmem_limit_bytes=vmem_limit),
    )(xprep, w_taps, g2, b2, mask)

    # (Cout, Mp_round) -> NCHW: single fused slice + permute (one output pass).
    y = out[:, :mp].reshape(cout, n, hp, wp)[:, :, :h_out, :w_out]
    return jnp.transpose(y, (1, 0, 2, 3))


# ------------------------------ reference -----------------------------------


def _reference(x_nchw, weight_oihw, gamma, beta, padding=1, eps=1e-5):
    y = lax.conv_general_dilated(
        x_nchw, weight_oihw, window_strides=(1, 1),
        padding=[(padding, padding), (padding, padding)],
        dimension_numbers=("NCHW", "OIHW", "NCHW"))
    mean = jnp.mean(y, axis=(0, 2, 3), keepdims=True)
    var = jnp.mean((y - mean) ** 2, axis=(0, 2, 3), keepdims=True)  # biased
    g = gamma.reshape(1, -1, 1, 1)
    b = beta.reshape(1, -1, 1, 1)
    return (y - mean) * lax.rsqrt(var + eps) * g + b


# --------------------------------- main --------------------------------------

if __name__ == "__main__":
    key = jax.random.PRNGKey(0)
    k_x, k_w, k_g, k_b = jax.random.split(key, 4)

    # _ConvBN(in_channels=4, out_channels=8, kernel_size=3, padding=1)
    N, CIN, COUT, H, W, K = 2, 4, 8, 16, 16, 3

    x = jax.random.normal(k_x, (N, CIN, H, W), dtype=jnp.float32)
    fan_in = CIN * K * K
    bound = 1.0 / (fan_in ** 0.5)
    weight = jax.random.uniform(k_w, (COUT, CIN, K, K), jnp.float32, -bound, bound)
    gamma = 1.0 + 0.1 * jax.random.normal(k_g, (COUT,), dtype=jnp.float32)
    beta = 0.1 * jax.random.normal(k_b, (COUT,), dtype=jnp.float32)

    out = conv_bn_forward(x, weight, gamma, beta, padding=1)
    out = jax.block_until_ready(out)
    assert out.shape == (N, COUT, H, W)

    # Tight check: reference with the same bf16 rounding of the MXU operands.
    xq = x.astype(jnp.bfloat16).astype(jnp.float32)
    wq = weight.astype(jnp.bfloat16).astype(jnp.float32)
    ref_q = _reference(xq, wq, gamma, beta, padding=1)
    assert jnp.allclose(out, ref_q, atol=1e-3, rtol=1e-3), \
        float(jnp.max(jnp.abs(out - ref_q)))

    # Loose check: full-f32 module semantics (bounds the bf16 MXU error after BN).
    ref_f32 = _reference(x, weight, gamma, beta, padding=1)
    assert jnp.allclose(out, ref_f32, atol=5e-2, rtol=5e-2), \
        float(jnp.max(jnp.abs(out - ref_f32)))

    print("KERNEL_OK")
</pallas_src>

<mosaic_0001>
module attributes {stable_mosaic.version = 11 : i64} {
  func.func @_fused_conv_bn_kernel(%arg0: i32, %arg1: i32, %arg2: i32, %arg3: memref<4x896xbf16, #tpu.memory_space<vmem>>, %arg4: memref<9x8x4xbf16, #tpu.memory_space<vmem>>, %arg5: memref<8x1xf32, #tpu.memory_space<vmem>>, %arg6: memref<8x1xf32, #tpu.memory_space<vmem>>, %arg7: memref<1x768xf32, #tpu.memory_space<vmem>>, %arg8: memref<8x768xf32, #tpu.memory_space<vmem>>, %arg9: memref<1x8x768xf32, #tpu.memory_space<vmem>>, %arg10: memref<8x1xf32, #tpu.memory_space<vmem>>, %arg11: memref<8x1xf32, #tpu.memory_space<vmem>>, %arg12: memref<1x1xf32, #tpu.memory_space<vmem>>, %arg13: memref<8x1xf32, #tpu.memory_space<vmem>>, %arg14: memref<8x1xf32, #tpu.memory_space<vmem>>) attributes {dimension_semantics = [#tpu.dimension_semantics<parallel>, #tpu.dimension_semantics<arbitrary>, #tpu.dimension_semantics<arbitrary>], iteration_bounds = array<i64: 1, 2, 1>, scalar_prefetch = 0 : i64, scratch_operands = 6 : i64, tpu.core_type = #tpu.core_type<tc>, window_params = [{transform_indices = @transform_0, window_bounds = array<i64: 4, 896>}, {transform_indices = @transform_1, window_bounds = array<i64: 9, 8, 4>}, {transform_indices = @transform_2, window_bounds = array<i64: 8, 1>}, {transform_indices = @transform_3, window_bounds = array<i64: 8, 1>}, {transform_indices = @transform_4, window_bounds = array<i64: 1, 768>}, {transform_indices = @transform_5, window_bounds = array<i64: 8, 768>}]} {
    %c0_i32 = arith.constant 0 : i32
    %0 = arith.cmpi eq, %arg1, %c0_i32 : i32
    %c0_i32_0 = arith.constant 0 : i32
    %1 = arith.cmpi eq, %arg2, %c0_i32_0 : i32
    %2 = arith.andi %0, %1 : i1
    %3 = arith.extui %2 : i1 to i32
    %c0_i32_1 = arith.constant 0 : i32
    %4 = arith.cmpi ne, %3, %c0_i32_1 : i32
    scf.if %4 {
      %cst = arith.constant 0.000000e+00 : f32
      %16 = vector.broadcast %cst : f32 to vector<8x1xf32>
      %c0 = arith.constant 0 : index
      %c0_8 = arith.constant 0 : index
      %17 = vector.load %arg10[%c0, %c0_8] : memref<8x1xf32, #tpu.memory_space<vmem>>, vector<8x1xf32>
      tpu.vector_store %arg10[%c0, %c0_8], %16 {strides = array<i32>} : memref<8x1xf32, #tpu.memory_space<vmem>>, vector<8x1xf32>,
      %cst_9 = arith.constant 0.000000e+00 : f32
      %18 = vector.broadcast %cst_9 : f32 to vector<8x1xf32>
      %c0_10 = arith.constant 0 : index
      %c0_11 = arith.constant 0 : index
      %19 = vector.load %arg11[%c0_10, %c0_11] : memref<8x1xf32, #tpu.memory_space<vmem>>, vector<8x1xf32>
      tpu.vector_store %arg11[%c0_10, %c0_11], %18 {strides = array<i32>} : memref<8x1xf32, #tpu.memory_space<vmem>>, vector<8x1xf32>,
      %cst_12 = arith.constant 0.000000e+00 : f32
      %20 = vector.broadcast %cst_12 : f32 to vector<1x1xf32>
      %c0_13 = arith.constant 0 : index
      %c0_14 = arith.constant 0 : index
      %21 = vector.load %arg12[%c0_13, %c0_14] : memref<1x1xf32, #tpu.memory_space<vmem>>, vector<1x1xf32>
      tpu.vector_store %arg12[%c0_13, %c0_14], %20 {strides = array<i32>} : memref<1x1xf32, #tpu.memory_space<vmem>>, vector<1x1xf32>,
    } else {
    }
    %c0_i32_2 = arith.constant 0 : i32
    %5 = arith.cmpi eq, %arg1, %c0_i32_2 : i32
    %6 = arith.extui %5 : i1 to i32
    %c0_i32_3 = arith.constant 0 : i32
    %7 = arith.cmpi ne, %6, %c0_i32_3 : i32
    scf.if %7 {
      %c0 = arith.constant 0 : index
      %c0_8 = arith.constant 0 : index
      %16 = vector.load %arg3[%c0, %c0_8] : memref<4x896xbf16, #tpu.memory_space<vmem>>, vector<4x896xbf16>
      %c0_9 = arith.constant 0 : index
      %c0_10 = arith.constant 0 : index
      %c0_11 = arith.constant 0 : index
      %17 = vector.load %arg4[%c0_9, %c0_10, %c0_11] : memref<9x8x4xbf16, #tpu.memory_space<vmem>>, vector<1x8x4xbf16>
      %18 = vector.shape_cast %17 : vector<1x8x4xbf16> to vector<8x4xbf16>
      %19 = vector.extract_strided_slice %16 {offsets = [0, 0], sizes = [4, 768], strides = [1, 1]} : vector<4x896xbf16> to vector<4x768xbf16>
      %cst = arith.constant dense<0.000000e+00> : vector<8x768xf32>
      %20 = tpu.matmul %18, %19, %cst {dimension_numbers = #tpu.dot_dimension_numbers<[1], [0], [0], [1], [0, 0, 1, 1], [], []>} : vector<8x4xbf16>, vector<4x768xbf16>, vector<8x768xf32> -> vector<8x768xf32>
      %c1 = arith.constant 1 : index
      %c0_12 = arith.constant 0 : index
      %c0_13 = arith.constant 0 : index
      %21 = vector.load %arg4[%c1, %c0_12, %c0_13] : memref<9x8x4xbf16, #tpu.memory_space<vmem>>, vector<1x8x4xbf16>
      %22 = vector.shape_cast %21 : vector<1x8x4xbf16> to vector<8x4xbf16>
      %23 = vector.extract_strided_slice %16 {offsets = [0, 1], sizes = [4, 768], strides = [1, 1]} : vector<4x896xbf16> to vector<4x768xbf16>
      %cst_14 = arith.constant dense<0.000000e+00> : vector<8x768xf32>
      %24 = tpu.matmul %22, %23, %cst_14 {dimension_numbers = #tpu.dot_dimension_numbers<[1], [0], [0], [1], [0, 0, 1, 1], [], []>} : vector<8x4xbf16>, vector<4x768xbf16>, vector<8x768xf32> -> vector<8x768xf32>
      %25 = arith.addf %20, %24 : vector<8x768xf32>
      %c2 = arith.constant 2 : index
      %c0_15 = arith.constant 0 : index
      %c0_16 = arith.constant 0 : index
      %26 = vector.load %arg4[%c2, %c0_15, %c0_16] : memref<9x8x4xbf16, #tpu.memory_space<vmem>>, vector<1x8x4xbf16>
      %27 = vector.shape_cast %26 : vector<1x8x4xbf16> to vector<8x4xbf16>
      %28 = vector.extract_strided_slice %16 {offsets = [0, 2], sizes = [4, 768], strides = [1, 1]} : vector<4x896xbf16> to vector<4x768xbf16>
      %cst_17 = arith.constant dense<0.000000e+00> : vector<8x768xf32>
      %29 = tpu.matmul %27, %28, %cst_17 {dimension_numbers = #tpu.dot_dimension_numbers<[1], [0], [0], [1], [0, 0, 1, 1], [], []>} : vector<8x4xbf16>, vector<4x768xbf16>, vector<8x768xf32> -> vector<8x768xf32>
      %30 = arith.addf %25, %29 : vector<8x768xf32>
      %c3 = arith.constant 3 : index
      %c0_18 = arith.constant 0 : index
      %c0_19 = arith.constant 0 : index
      %31 = vector.load %arg4[%c3, %c0_18, %c0_19] : memref<9x8x4xbf16, #tpu.memory_space<vmem>>, vector<1x8x4xbf16>
      %32 = vector.shape_cast %31 : vector<1x8x4xbf16> to vector<8x4xbf16>
      %33 = vector.extract_strided_slice %16 {offsets = [0, 18], sizes = [4, 768], strides = [1, 1]} : vector<4x896xbf16> to vector<4x768xbf16>
      %cst_20 = arith.constant dense<0.000000e+00> : vector<8x768xf32>
      %34 = tpu.matmul %32, %33, %cst_20 {dimension_numbers = #tpu.dot_dimension_numbers<[1], [0], [0], [1], [0, 0, 1, 1], [], []>} : vector<8x4xbf16>, vector<4x768xbf16>, vector<8x768xf32> -> vector<8x768xf32>
      %35 = arith.addf %30, %34 : vector<8x768xf32>
      %c4 = arith.constant 4 : index
      %c0_21 = arith.constant 0 : index
      %c0_22 = arith.constant 0 : index
      %36 = vector.load %arg4[%c4, %c0_21, %c0_22] : memref<9x8x4xbf16, #tpu.memory_space<vmem>>, vector<1x8x4xbf16>
      %37 = vector.shape_cast %36 : vector<1x8x4xbf16> to vector<8x4xbf16>
      %38 = vector.extract_strided_slice %16 {offsets = [0, 19], sizes = [4, 768], strides = [1, 1]} : vector<4x896xbf16> to vector<4x768xbf16>
      %cst_23 = arith.constant dense<0.000000e+00> : vector<8x768xf32>
      %39 = tpu.matmul %37, %38, %cst_23 {dimension_numbers = #tpu.dot_dimension_numbers<[1], [0], [0], [1], [0, 0, 1, 1], [], []>} : vector<8x4xbf16>, vector<4x768xbf16>, vector<8x768xf32> -> vector<8x768xf32>
      %40 = arith.addf %35, %39 : vector<8x768xf32>
      %c5 = arith.constant 5 : index
      %c0_24 = arith.constant 0 : index
      %c0_25 = arith.constant 0 : index
      %41 = vector.load %arg4[%c5, %c0_24, %c0_25] : memref<9x8x4xbf16, #tpu.memory_space<vmem>>, vector<1x8x4xbf16>
      %42 = vector.shape_cast %41 : vector<1x8x4xbf16> to vector<8x4xbf16>
      %43 = vector.extract_strided_slice %16 {offsets = [0, 20], sizes = [4, 768], strides = [1, 1]} : vector<4x896xbf16> to vector<4x768xbf16>
      %cst_26 = arith.constant dense<0.000000e+00> : vector<8x768xf32>
      %44 = tpu.matmul %42, %43, %cst_26 {dimension_numbers = #tpu.dot_dimension_numbers<[1], [0], [0], [1], [0, 0, 1, 1], [], []>} : vector<8x4xbf16>, vector<4x768xbf16>, vector<8x768xf32> -> vector<8x768xf32>
      %45 = arith.addf %40, %44 : vector<8x768xf32>
      %c6 = arith.constant 6 : index
      %c0_27 = arith.constant 0 : index
      %c0_28 = arith.constant 0 : index
      %46 = vector.load %arg4[%c6, %c0_27, %c0_28] : memref<9x8x4xbf16, #tpu.memory_space<vmem>>, vector<1x8x4xbf16>
      %47 = vector.shape_cast %46 : vector<1x8x4xbf16> to vector<8x4xbf16>
      %48 = vector.extract_strided_slice %16 {offsets = [0, 36], sizes = [4, 768], strides = [1, 1]} : vector<4x896xbf16> to vector<4x768xbf16>
      %cst_29 = arith.constant dense<0.000000e+00> : vector<8x768xf32>
      %49 = tpu.matmul %47, %48, %cst_29 {dimension_numbers = #tpu.dot_dimension_numbers<[1], [0], [0], [1], [0, 0, 1, 1], [], []>} : vector<8x4xbf16>, vector<4x768xbf16>, vector<8x768xf32> -> vector<8x768xf32>
      %50 = arith.addf %45, %49 : vector<8x768xf32>
      %c7 = arith.constant 7 : index
      %c0_30 = arith.constant 0 : index
      %c0_31 = arith.constant 0 : index
      %51 = vector.load %arg4[%c7, %c0_30, %c0_31] : memref<9x8x4xbf16, #tpu.memory_space<vmem>>, vector<1x8x4xbf16>
      %52 = vector.shape_cast %51 : vector<1x8x4xbf16> to vector<8x4xbf16>
      %53 = vector.extract_strided_slice %16 {offsets = [0, 37], sizes = [4, 768], strides = [1, 1]} : vector<4x896xbf16> to vector<4x768xbf16>
      %cst_32 = arith.constant dense<0.000000e+00> : vector<8x768xf32>
      %54 = tpu.matmul %52, %53, %cst_32 {dimension_numbers = #tpu.dot_dimension_numbers<[1], [0], [0], [1], [0, 0, 1, 1], [], []>} : vector<8x4xbf16>, vector<4x768xbf16>, vector<8x768xf32> -> vector<8x768xf32>
      %55 = arith.addf %50, %54 : vector<8x768xf32>
      %c8 = arith.constant 8 : index
      %c0_33 = arith.constant 0 : index
      %c0_34 = arith.constant 0 : index
      %56 = vector.load %arg4[%c8, %c0_33, %c0_34] : memref<9x8x4xbf16, #tpu.memory_space<vmem>>, vector<1x8x4xbf16>
      %57 = vector.shape_cast %56 : vector<1x8x4xbf16> to vector<8x4xbf16>
      %58 = vector.extract_strided_slice %16 {offsets = [0, 38], sizes = [4, 768], strides = [1, 1]} : vector<4x896xbf16> to vector<4x768xbf16>
      %cst_35 = arith.constant dense<0.000000e+00> : vector<8x768xf32>
      %59 = tpu.matmul %57, %58, %cst_35 {dimension_numbers = #tpu.dot_dimension_numbers<[1], [0], [0], [1], [0, 0, 1, 1], [], []>} : vector<8x4xbf16>, vector<4x768xbf16>, vector<8x768xf32> -> vector<8x768xf32>
      %60 = arith.addf %55, %59 : vector<8x768xf32>
      %61 = arith.index_cast %arg2 : i32 to index
      %c0_36 = arith.constant 0 : index
      %c0_37 = arith.constant 0 : index
      %62 = vector.load %arg9[%61, %c0_36, %c0_37] : memref<1x8x768xf32, #tpu.memory_space<vmem>>, vector<1x8x768xf32>
      %63 = vector.shape_cast %62 : vector<1x8x768xf32> to vector<8x768xf32>
      %64 = vector.shape_cast %60 : vector<8x768xf32> to vector<1x8x768xf32>
      tpu.vector_store %arg9[%61, %c0_36, %c0_37], %64 {strides = array<i32>} : memref<1x8x768xf32, #tpu.memory_space<vmem>>, vector<1x8x768xf32>,
      %c0_38 = arith.constant 0 : index
      %c0_39 = arith.constant 0 : index
      %65 = vector.load %arg7[%c0_38, %c0_39] : memref<1x768xf32, #tpu.memory_space<vmem>>, vector<1x768xf32>
      %cst_40 = arith.constant dense<0.000000e+00> : vector<1xf32>
      %66 = vector.multi_reduction <add>, %65, %cst_40 [1] : vector<1x768xf32> to vector<1xf32>
      %67 = vector.shape_cast %66 : vector<1xf32> to vector<1x1xf32>
      %68 = vector.broadcast %65 : vector<1x768xf32> to vector<8x768xf32>
      %69 = arith.mulf %60, %68 : vector<8x768xf32>
      %cst_41 = arith.constant dense<0.000000e+00> : vector<8xf32>
      %70 = vector.multi_reduction <add>, %69, %cst_41 [1] : vector<8x768xf32> to vector<8xf32>
      %71 = vector.shape_cast %70 : vector<8xf32> to vector<8x1xf32>
      %cst_42 = arith.constant 1.000000e+00 : f32
      %72 = vector.broadcast %cst_42 : f32 to vector<1x1xf32>
      %73 = arith.maximumf %67, %72 : vector<1x1xf32>
      %74 = vector.broadcast %73 : vector<1x1xf32> to vector<8x1xf32>
      %75 = arith.divf %71, %74 : vector<8x1xf32>
      %76 = vector.broadcast %75 : vector<8x1xf32> to vector<8x768xf32>
      %77 = arith.subf %60, %76 : vector<8x768xf32>
      %78 = vector.broadcast %65 : vector<1x768xf32> to vector<8x768xf32>
      %79 = arith.mulf %77, %78 : vector<8x768xf32>
      %80 = arith.mulf %79, %79 : vector<8x768xf32>
      %cst_43 = arith.constant dense<0.000000e+00> : vector<8xf32>
      %81 = vector.multi_reduction <add>, %80, %cst_43 [1] : vector<8x768xf32> to vector<8xf32>
      %82 = vector.shape_cast %81 : vector<8xf32> to vector<8x1xf32>
      %c0_44 = arith.constant 0 : index
      %c0_45 = arith.constant 0 : index
      %83 = vector.load %arg12[%c0_44, %c0_45] : memref<1x1xf32, #tpu.memory_space<vmem>>, vector<1x1xf32>
      %84 = arith.addf %83, %67 : vector<1x1xf32>
      %cst_46 = arith.constant 1.000000e+00 : f32
      %85 = vector.broadcast %cst_46 : f32 to vector<1x1xf32>
      %86 = arith.maximumf %84, %85 : vector<1x1xf32>
      %87 = arith.divf %67, %86 : vector<1x1xf32>
      %c0_47 = arith.constant 0 : index
      %c0_48 = arith.constant 0 : index
      %88 = vector.load %arg10[%c0_47, %c0_48] : memref<8x1xf32, #tpu.memory_space<vmem>>, vector<8x1xf32>
      %89 = arith.subf %75, %88 : vector<8x1xf32>
      %c0_49 = arith.constant 0 : index
      %c0_50 = arith.constant 0 : index
      %90 = vector.load %arg10[%c0_49, %c0_50] : memref<8x1xf32, #tpu.memory_space<vmem>>, vector<8x1xf32>
      %91 = vector.broadcast %87 : vector<1x1xf32> to vector<8x1xf32>
      %92 = arith.mulf %89, %91 : vector<8x1xf32>
      %93 = arith.addf %90, %92 : vector<8x1xf32>
      %c0_51 = arith.constant 0 : index
      %c0_52 = arith.constant 0 : index
      %94 = vector.load %arg10[%c0_51, %c0_52] : memref<8x1xf32, #tpu.memory_space<vmem>>, vector<8x1xf32>
      tpu.vector_store %arg10[%c0_51, %c0_52], %93 {strides = array<i32>} : memref<8x1xf32, #tpu.memory_space<vmem>>, vector<8x1xf32>,
      %c0_53 = arith.constant 0 : index
      %c0_54 = arith.constant 0 : index
      %95 = vector.load %arg11[%c0_53, %c0_54] : memref<8x1xf32, #tpu.memory_space<vmem>>, vector<8x1xf32>
      %96 = arith.addf %95, %82 : vector<8x1xf32>
      %97 = arith.mulf %89, %89 : vector<8x1xf32>
      %98 = arith.mulf %83, %87 : vector<1x1xf32>
      %99 = vector.broadcast %98 : vector<1x1xf32> to vector<8x1xf32>
      %100 = arith.mulf %97, %99 : vector<8x1xf32>
      %101 = arith.addf %96, %100 : vector<8x1xf32>
      %c0_55 = arith.constant 0 : index
      %c0_56 = arith.constant 0 : index
      %102 = vector.load %arg11[%c0_55, %c0_56] : memref<8x1xf32, #tpu.memory_space<vmem>>, vector<8x1xf32>
      tpu.vector_store %arg11[%c0_55, %c0_56], %101 {strides = array<i32>} : memref<8x1xf32, #tpu.memory_space<vmem>>, vector<8x1xf32>,
      %c0_57 = arith.constant 0 : index
      %c0_58 = arith.constant 0 : index
      %103 = vector.load %arg12[%c0_57, %c0_58] : memref<1x1xf32, #tpu.memory_space<vmem>>, vector<1x1xf32>
      tpu.vector_store %arg12[%c0_57, %c0_58], %84 {strides = array<i32>} : memref<1x1xf32, #tpu.memory_space<vmem>>, vector<1x1xf32>,
    } else {
    }
    %c1_i32 = arith.constant 1 : i32
    %8 = arith.cmpi eq, %arg1, %c1_i32 : i32
    %c0_i32_4 = arith.constant 0 : i32
    %9 = arith.cmpi eq, %arg2, %c0_i32_4 : i32
    %10 = arith.andi %8, %9 : i1
    %11 = arith.extui %10 : i1 to i32
    %c0_i32_5 = arith.constant 0 : i32
    %12 = arith.cmpi ne, %11, %c0_i32_5 : i32
    scf.if %12 {
      %c0 = arith.constant 0 : index
      %c0_8 = arith.constant 0 : index
      %16 = vector.load %arg11[%c0, %c0_8] : memref<8x1xf32, #tpu.memory_space<vmem>>, vector<8x1xf32>
      %cst = arith.constant 0.001953125 : f32
      %17 = vector.broadcast %cst : f32 to vector<8x1xf32>
      %18 = arith.mulf %16, %17 : vector<8x1xf32>
      %c0_9 = arith.constant 0 : index
      %c0_10 = arith.constant 0 : index
      %19 = vector.load %arg5[%c0_9, %c0_10] : memref<8x1xf32, #tpu.memory_space<vmem>>, vector<8x1xf32>
      %cst_11 = arith.constant 9.99999974E-6 : f32
      %20 = vector.broadcast %cst_11 : f32 to vector<8x1xf32>
      %21 = arith.addf %18, %20 : vector<8x1xf32>
      %22 = math.rsqrt %21 : vector<8x1xf32>
      %23 = arith.mulf %19, %22 : vector<8x1xf32>
      %c0_12 = arith.constant 0 : index
      %c0_13 = arith.constant 0 : index
      %24 = vector.load %arg13[%c0_12, %c0_13] : memref<8x1xf32, #tpu.memory_space<vmem>>, vector<8x1xf32>
      tpu.vector_store %arg13[%c0_12, %c0_13], %23 {strides = array<i32>} : memref<8x1xf32, #tpu.memory_space<vmem>>, vector<8x1xf32>,
      %c0_14 = arith.constant 0 : index
      %c0_15 = arith.constant 0 : index
      %25 = vector.load %arg6[%c0_14, %c0_15] : memref<8x1xf32, #tpu.memory_space<vmem>>, vector<8x1xf32>
      %c0_16 = arith.constant 0 : index
      %c0_17 = arith.constant 0 : index
      %26 = vector.load %arg10[%c0_16, %c0_17] : memref<8x1xf32, #tpu.memory_space<vmem>>, vector<8x1xf32>
      %27 = arith.mulf %26, %23 : vector<8x1xf32>
      %28 = arith.subf %25, %27 : vector<8x1xf32>
      %c0_18 = arith.constant 0 : index
      %c0_19 = arith.constant 0 : index
      %29 = vector.load %arg14[%c0_18, %c0_19] : memref<8x1xf32, #tpu.memory_space<vmem>>, vector<8x1xf32>
      tpu.vector_store %arg14[%c0_18, %c0_19], %28 {strides = array<i32>} : memref<8x1xf32, #tpu.memory_space<vmem>>, vector<8x1xf32>,
    } else {
    }
    %c1_i32_6 = arith.constant 1 : i32
    %13 = arith.cmpi eq, %arg1, %c1_i32_6 : i32
    %14 = arith.extui %13 : i1 to i32
    %c0_i32_7 = arith.constant 0 : i32
    %15 = arith.cmpi ne, %14, %c0_i32_7 : i32
    scf.if %15 {
      %16 = arith.index_cast %arg2 : i32 to index
      %c0 = arith.constant 0 : index
      %c0_8 = arith.constant 0 : index
      %17 = vector.load %arg9[%16, %c0, %c0_8] : memref<1x8x768xf32, #tpu.memory_space<vmem>>, vector<1x8x768xf32>
      %18 = vector.shape_cast %17 : vector<1x8x768xf32> to vector<8x768xf32>
      %c0_9 = arith.constant 0 : index
      %c0_10 = arith.constant 0 : index
      %19 = vector.load %arg13[%c0_9, %c0_10] : memref<8x1xf32, #tpu.memory_space<vmem>>, vector<8x1xf32>
      %20 = vector.broadcast %19 : vector<8x1xf32> to vector<8x768xf32>
      %21 = arith.mulf %18, %20 : vector<8x768xf32>
      %c0_11 = arith.constant 0 : index
      %c0_12 = arith.constant 0 : index
      %22 = vector.load %arg14[%c0_11, %c0_12] : memref<8x1xf32, #tpu.memory_space<vmem>>, vector<8x1xf32>
      %23 = vector.broadcast %22 : vector<8x1xf32> to vector<8x768xf32>
      %24 = arith.addf %21, %23 : vector<8x768xf32>
      %c0_13 = arith.constant 0 : index
      %c0_14 = arith.constant 0 : index
      %25 = vector.load %arg8[%c0_13, %c0_14] : memref<8x768xf32, #tpu.memory_space<vmem>>, vector<8x768xf32>
      tpu.vector_store %arg8[%c0_13, %c0_14], %24 {strides = array<i32>} : memref<8x768xf32, #tpu.memory_space<vmem>>, vector<8x768xf32>,
    } else {
    }
    return
  }
  func.func @transform_0(%arg0: i32, %arg1: i32, %arg2: i32) -> (i32, i32) {
    %c1_i32 = arith.constant 1 : i32
    %0 = arith.subi %c1_i32, %arg1 : i32
    %1 = arith.muli %arg2, %0 : i32
    %c0_i32 = arith.constant 0 : i32
    %c0_i32_0 = arith.constant 0 : i32
    return %c0_i32, %1 : i32, i32
  }
  func.func @transform_1(%arg0: i32, %arg1: i32, %arg2: i32) -> (i32, i32, i32) {
    %c0_i32 = arith.constant 0 : i32
    %c0_i32_0 = arith.constant 0 : i32
    %c0_i32_1 = arith.constant 0 : i32
    return %c0_i32, %arg0, %c0_i32_0 : i32, i32, i32
  }
  func.func @transform_2(%arg0: i32, %arg1: i32, %arg2: i32) -> (i32, i32) {
    %c0_i32 = arith.constant 0 : i32
    %c0_i32_0 = arith.constant 0 : i32
    return %arg0, %c0_i32 : i32, i32
  }
  func.func @transform_3(%arg0: i32, %arg1: i32, %arg2: i32) -> (i32, i32) {
    %c0_i32 = arith.constant 0 : i32
    %c0_i32_0 = arith.constant 0 : i32
    return %arg0, %c0_i32 : i32, i32
  }
  func.func @transform_4(%arg0: i32, %arg1: i32, %arg2: i32) -> (i32, i32) {
    %c1_i32 = arith.constant 1 : i32
    %0 = arith.subi %c1_i32, %arg1 : i32
    %1 = arith.muli %arg2, %0 : i32
    %c0_i32 = arith.constant 0 : i32
    %c0_i32_0 = arith.constant 0 : i32
    return %c0_i32, %1 : i32, i32
  }
  func.func @transform_5(%arg0: i32, %arg1: i32, %arg2: i32) -> (i32, i32) {
    %0 = arith.muli %arg1, %arg2 : i32
    %c0_i32 = arith.constant 0 : i32
    return %arg0, %0 : i32, i32
  }
}

</mosaic_0001>

<llo_original>
// kernel: conv_bn_forward.1
$region0: #{conv_bn_forward.1}
  #allocation0 [shape = 'u32[]', space=smem, size = 0x4, offset = 0x4, fixed_abs, tag = 'smem constant byte address 0x4 - core index']
  #allocation1 [shape = 'u32[144,128]{1,0:T(1,128)}', space=vmem, size = 0x12000, scoped, tag = 'internal scratch']
  #allocation2 [shape = 'f32[1,8,768]{2,1,0:T(8,128)}', space=vmem, size = 0x6000, scoped, tag = 'scratch operand']
  #allocation3 [shape = 'f32[8,1]{1,0:T(8,128)}', space=vmem, size = 0x1000, scoped, tag = 'scratch operand']
  #allocation4 [shape = 'f32[8,1]{1,0:T(8,128)}', space=vmem, size = 0x1000, scoped, tag = 'scratch operand']
  #allocation5 [shape = 'f32[1,1]{1,0:T(1,128)}', space=vmem, size = 0x200, scoped, tag = 'scratch operand']
  #allocation6 [shape = 'f32[8,1]{1,0:T(8,128)}', space=vmem, size = 0x1000, scoped, tag = 'scratch operand']
  #allocation7 [shape = 'f32[8,1]{1,0:T(8,128)}', space=vmem, size = 0x1000, scoped, tag = 'scratch operand']
  %s0 = inlined_call_operand.vmem [shape: bf16[4,896], index: 0, kind: input, shape index: {}]
  %s1 = inlined_call_operand.vmem [shape: bf16[9,8,4], index: 1, kind: input, shape index: {}]
  %s2 = inlined_call_operand.vmem [shape: f32[8,1], index: 2, kind: input, shape index: {}]
  %s3 = inlined_call_operand.vmem [shape: f32[8,1], index: 3, kind: input, shape index: {}]
  %s4 = inlined_call_operand.vmem [shape: f32[1,768], index: 4, kind: input, shape index: {}]
  %s5 = inlined_call_operand.vmem [shape: f32[8,768], index: 5, kind: output, shape index: {}]
  %s6 = sld [smem:[#allocation0]]
  $region69: #{conv_bn_forward.1} parent=0
    _
  %s8 = ssub.s32 1, %s6
  %s9 = scalar_select 0, %s8, %s6
  loop: start=0, step=1, limit=4
  $region2: #{conv_bn_forward.1} parent=0 // loop_pre_header
    _
  $region3: #{conv_bn_forward.1} parent=0 // loop_header
    %s11 = sphi 0, %s15
    %p12 = scmp.ge.s32.totalorder %s11, 4
    %s18 = sphi 0, %s37
    %s19 = sphi 0, %s33
    %s20 = sphi 0, %s29
    %s21 = sphi 0, %s18
    %s22 = sphi 0, %s19
    %s23 = sphi 0, %s20
    %s24 = sphi 0, %s21
    %s25 = sphi 0, %s22
    %s26 = sphi 0, %s23
    %s44 = sphi 0, %s46
    %s47 = sphi 0, %s44
    %s48 = sphi 0, %s47
    %s64 = sphi 0, %s48
    %s70 = sphi 0, %s72
    %s73 = sphi 0, %s70
    %s74 = sphi 0, %s73
    %s90 = sphi 0, %s74
    %s96 = sphi 0, %s98
    %s99 = sphi 0, %s96
    %s100 = sphi 0, %s99
    %s116 = sphi 0, %s100
    %s122 = sphi 0, %s124
    %s125 = sphi 0, %s122
    %s126 = sphi 0, %s125
    %s142 = sphi 0, %s126
    %s152 = sphi 0, %s154
    %s155 = sphi 0, %s152
    %s156 = sphi 0, %s155
    %s172 = sphi 0, %s156
    %s182 = sphi 0, %s184
    %s185 = sphi 0, %s182
    %s186 = sphi 0, %s185
    %s202 = sphi 0, %s186
  $region4: #{conv_bn_forward.1} parent=0 // loop_header_branch
    %14 = sbr.rel (%p12) target = $region8
  $region5: #{conv_bn_forward.1} parent=0 // loop_body
    %s16 = ssub.s32 %s11, 1
    %s17 = ssub.s32 %s11, 2
    %s27 = sadd.s32 1, %s20
    %p28 = scmp.ge.s32.totalorder %s27, 1
    %s29 = scalar_select %p28, 0, %s27
    %s30 = sadd.s32 1, %s19
    %s31 = scalar_select %p28, %s30, %s19
    %p32 = scmp.ge.s32.totalorder %s31, 2
    %s33 = scalar_select %p32, 0, %s31
    %s34 = sadd.s32 1, %s18
    %s35 = scalar_select %p32, %s34, %s18
    %p36 = scmp.ge.s32.totalorder %s35, 1
    %s37 = scalar_select %p36, 0, %s35
    %s38 = ssub.s32 1, %s19
    %s39 = smul.u32 %s20, %s38
    %s40 = ssub.s32 1, %s33
    %s41 = smul.u32 %s29, %s40
    %s42 = ssub.s32 %s39, %s41
    %p43 = scmp.eq.s32.totalorder %s42, 0
    %s45 = sadd.s32 %s44, 1
    %s46 = scalar_select %p43, %s44, %s45
    %p49 = pneg %p43
    %p50 = scmp.eq.s32.totalorder %s11, 1
    %p51 = por %p49, %p50
    %p52 = scmp.ne.s32.totalorder %s44, %s47
    %p53 = scmp.eq.s32.totalorder %s11, 0
    %p54 = por %p52, %p53
    %p55 = scmp.ne.s32.totalorder %s44, %s47
    %p56 = scmp.eq.s32.totalorder %s16, 1
    %p57 = por %p55, %p56
    %p58 = scmp.ne.s32.totalorder %s47, %s48
    %p59 = scmp.eq.s32.totalorder %s16, 0
    %p60 = por %p58, %p59
    %p61 = scmp.ne.s32.totalorder %s47, %s48
    %p62 = scmp.eq.s32.totalorder %s17, 1
    %p63 = por %p61, %p62
    %p65 = scmp.ne.s32.totalorder %s48, %s64
    %p66 = scmp.eq.s32.totalorder %s17, 0
    %p67 = por %p65, %p66
    %s68 = ssub.s32 %s18, %s37
    %p69 = scmp.eq.s32.totalorder %s68, 0
    %s71 = sadd.s32 %s70, 1
    %s72 = scalar_select %p69, %s70, %s71
    %p75 = pneg %p69
    %p76 = scmp.eq.s32.totalorder %s11, 1
    %p77 = por %p75, %p76
    %p78 = scmp.ne.s32.totalorder %s70, %s73
    %p79 = scmp.eq.s32.totalorder %s11, 0
    %p80 = por %p78, %p79
    %p81 = scmp.ne.s32.totalorder %s70, %s73
    %p82 = scmp.eq.s32.totalorder %s16, 1
    %p83 = por %p81, %p82
    %p84 = scmp.ne.s32.totalorder %s73, %s74
    %p85 = scmp.eq.s32.totalorder %s16, 0
    %p86 = por %p84, %p85
    %p87 = scmp.ne.s32.totalorder %s73, %s74
    %p88 = scmp.eq.s32.totalorder %s17, 1
    %p89 = por %p87, %p88
    %p91 = scmp.ne.s32.totalorder %s74, %s90
    %p92 = scmp.eq.s32.totalorder %s17, 0
    %p93 = por %p91, %p92
    %s94 = ssub.s32 %s18, %s37
    %p95 = scmp.eq.s32.totalorder %s94, 0
    %s97 = sadd.s32 %s96, 1
    %s98 = scalar_select %p95, %s96, %s97
    %p101 = pneg %p95
    %p102 = scmp.eq.s32.totalorder %s11, 1
    %p103 = por %p101, %p102
    %p104 = scmp.ne.s32.totalorder %s96, %s99
    %p105 = scmp.eq.s32.totalorder %s11, 0
    %p106 = por %p104, %p105
    %p107 = scmp.ne.s32.totalorder %s96, %s99
    %p108 = scmp.eq.s32.totalorder %s16, 1
    %p109 = por %p107, %p108
    %p110 = scmp.ne.s32.totalorder %s99, %s100
    %p111 = scmp.eq.s32.totalorder %s16, 0
    %p112 = por %p110, %p111
    %p113 = scmp.ne.s32.totalorder %s99, %s100
    %p114 = scmp.eq.s32.totalorder %s17, 1
    %p115 = por %p113, %p114
    %p117 = scmp.ne.s32.totalorder %s100, %s116
    %p118 = scmp.eq.s32.totalorder %s17, 0
    %p119 = por %p117, %p118
    %s120 = ssub.s32 %s18, %s37
    %p121 = scmp.eq.s32.totalorder %s120, 0
    %s123 = sadd.s32 %s122, 1
    %s124 = scalar_select %p121, %s122, %s123
    %p127 = pneg %p121
    %p128 = scmp.eq.s32.totalorder %s11, 1
    %p129 = por %p127, %p128
    %p130 = scmp.ne.s32.totalorder %s122, %s125
    %p131 = scmp.eq.s32.totalorder %s11, 0
    %p132 = por %p130, %p131
    %p133 = scmp.ne.s32.totalorder %s122, %s125
    %p134 = scmp.eq.s32.totalorder %s16, 1
    %p135 = por %p133, %p134
    %p136 = scmp.ne.s32.totalorder %s125, %s126
    %p137 = scmp.eq.s32.totalorder %s16, 0
    %p138 = por %p136, %p137
    %p139 = scmp.ne.s32.totalorder %s125, %s126
    %p140 = scmp.eq.s32.totalorder %s17, 1
    %p141 = por %p139, %p140
    %p143 = scmp.ne.s32.totalorder %s126, %s142
    %p144 = scmp.eq.s32.totalorder %s17, 0
    %p145 = por %p143, %p144
    %s146 = ssub.s32 1, %s19
    %s147 = smul.u32 %s20, %s146
    %s148 = ssub.s32 1, %s33
    %s149 = smul.u32 %s29, %s148
    %s150 = ssub.s32 %s147, %s149
    %p151 = scmp.eq.s32.totalorder %s150, 0
    %s153 = sadd.s32 %s152, 1
    %s154 = scalar_select %p151, %s152, %s153
    %p157 = pneg %p151
    %p158 = scmp.eq.s32.totalorder %s11, 1
    %p159 = por %p157, %p158
    %p160 = scmp.ne.s32.totalorder %s152, %s155
    %p161 = scmp.eq.s32.totalorder %s11, 0
    %p162 = por %p160, %p161
    %p163 = scmp.ne.s32.totalorder %s152, %s155
    %p164 = scmp.eq.s32.totalorder %s16, 1
    %p165 = por %p163, %p164
    %p166 = scmp.ne.s32.totalorder %s155, %s156
    %p167 = scmp.eq.s32.totalorder %s16, 0
    %p168 = por %p166, %p167
    %p169 = scmp.ne.s32.totalorder %s155, %s156
    %p170 = scmp.eq.s32.totalorder %s17, 1
    %p171 = por %p169, %p170
    %p173 = scmp.ne.s32.totalorder %s156, %s172
    %p174 = scmp.eq.s32.totalorder %s17, 0
    %p175 = por %p173, %p174
    %s176 = smul.u32 %s19, %s20
    %s177 = smul.u32 %s33, %s29
    %s178 = ssub.s32 %s18, %s37
    %s179 = ssub.s32 %s176, %s177
    %s180 = sor.u32 %s178, %s179
    %p181 = scmp.eq.s32.totalorder %s180, 0
    %s183 = sadd.s32 %s182, 1
    %s184 = scalar_select %p181, %s182, %s183
    %p187 = pneg %p181
    %p188 = scmp.eq.s32.totalorder %s11, 1
    %p189 = por %p187, %p188
    %p190 = scmp.ne.s32.totalorder %s182, %s185
    %p191 = scmp.eq.s32.totalorder %s11, 0
    %p192 = por %p190, %p191
    %p193 = scmp.ne.s32.totalorder %s182, %s185
    %p194 = scmp.eq.s32.totalorder %s16, 1
    %p195 = por %p193, %p194
    %p196 = scmp.ne.s32.totalorder %s185, %s186
    %p197 = scmp.eq.s32.totalorder %s16, 0
    %p198 = por %p196, %p197
    %p199 = scmp.ne.s32.totalorder %s185, %s186
    %p200 = scmp.eq.s32.totalorder %s17, 1
    %p201 = por %p199, %p200
    %p203 = scmp.ne.s32.totalorder %s186, %s202
    %p204 = scmp.eq.s32.totalorder %s17, 0
    %p205 = por %p203, %p204
    %p206 = scmp.le.s32.totalorder 1, %s11
    %p207 = scmp.lt.s32.totalorder %s11, 3
    %p208 = pnand %p206, %p207
    %p209 = pneg %p208
    // Predicated region
    $region9: #{conv_bn_forward.1} parent=5 // pred_check
      _
    $region10: #{conv_bn_forward.1} parent=5 // pred_check_branch
      %211 = sbr.rel (%p208) target = $region12
    $region11: #{conv_bn_forward.1} parent=5 // pred_region
      %s212 = ssub.s32 %s11, 1
      // Predicated region
      $region13: #{conv_bn_forward.1} parent=11 // pred_check
        %p213 = pneg %p86
      $region14: #{conv_bn_forward.1} parent=11 // pred_check_branch
        %215 = sbr.rel (%p213) target = $region16
      $region15: #{conv_bn_forward.1} parent=11 // pred_region
        %p216 = scmp.lt.s32.totalorder %s21, 0
        %s217 = scalar_select %p216, %s21, 0
        %s218 = smul.addr %s217, 4
        %s219 = scalar_lea.vmem %s1, %s218
      $region16: #{conv_bn_forward.1} parent=11 // pred_fallthru
        _
      // Predicated region
      $region17: #{conv_bn_forward.1} parent=11 // pred_check
        %p220 = pneg %p112
      $region18: #{conv_bn_forward.1} parent=11 // pred_check_branch
        %222 = sbr.rel (%p220) target = $region20
      $region19: #{conv_bn_forward.1} parent=11 // pred_region
        %p223 = scmp.lt.s32.totalorder %s21, 0
        %s224 = scalar_select %p223, %s21, 0
        %s225 = smul.addr %s224, 8
        %s226 = scalar_lea.vmem %s2, %s225
      $region20: #{conv_bn_forward.1} parent=11 // pred_fallthru
        _
      // Predicated region
      $region21: #{conv_bn_forward.1} parent=11 // pred_check
        %p227 = pneg %p138
      $region22: #{conv_bn_forward.1} parent=11 // pred_check_branch
        %229 = sbr.rel (%p227) target = $region24
      $region23: #{conv_bn_forward.1} parent=11 // pred_region
        %p230 = scmp.lt.s32.totalorder %s21, 0
        %s231 = scalar_select %p230, %s21, 0
        %s232 = smul.addr %s231, 8
        %s233 = scalar_lea.vmem %s3, %s232
      $region24: #{conv_bn_forward.1} parent=11 // pred_fallthru
        _
    $region12: #{conv_bn_forward.1} parent=5 // pred_fallthru
      _
    %p234 = scmp.lt.s32.totalorder %s11, 2
    // Predicated region
    $region25: #{conv_bn_forward.1} parent=5 // pred_check
      %p235 = pneg %p234
    $region26: #{conv_bn_forward.1} parent=5 // pred_check_branch
      %237 = sbr.rel (%p235) target = $region28
    $region27: #{conv_bn_forward.1} parent=5 // pred_region
      // Predicated region
      $region29: #{conv_bn_forward.1} parent=27 // pred_check
        %p238 = pneg %p54
      $region30: #{conv_bn_forward.1} parent=27 // pred_check_branch
        %240 = sbr.rel (%p238) target = $region32
      $region31: #{conv_bn_forward.1} parent=27 // pred_region
        %s241 = ssub.s32 1, %s19
        %s242 = smul.u32 %s20, %s241
        %s243 = smul.u32 7, %s242
        %p244 = scmp.lt.s32.totalorder %s243, 6
        %s245 = scalar_select %p244, %s243, 6
        %s246 = smul.addr %s245, 2
        %s247 = scalar_lea.vmem %s0, %s246
        %s248 = ssub.s32 1, %s19
        %s249 = smul.u32 %s20, %s248
        %s250 = smul.u32 7, %s249
      $region32: #{conv_bn_forward.1} parent=27 // pred_fallthru
        _
      // Predicated region
      $region33: #{conv_bn_forward.1} parent=27 // pred_check
        %p251 = pneg %p162
      $region34: #{conv_bn_forward.1} parent=27 // pred_check_branch
        %253 = sbr.rel (%p251) target = $region36
      $region35: #{conv_bn_forward.1} parent=27 // pred_region
        %s254 = ssub.s32 1, %s19
        %s255 = smul.u32 %s20, %s254
        %s256 = smul.u32 6, %s255
        %p257 = scmp.lt.s32.totalorder %s256, 5
        %s258 = scalar_select %p257, %s256, 5
        %s259 = scalar_lea.vmem %s4, %s258
        %s260 = ssub.s32 1, %s19
        %s261 = smul.u32 %s20, %s260
        %s262 = smul.u32 6, %s261
      $region36: #{conv_bn_forward.1} parent=27 // pred_fallthru
        _
    $region28: #{conv_bn_forward.1} parent=5 // pred_fallthru
      _
    %p263 = scmp.le.s32.totalorder 1, %s11
    %p264 = scmp.lt.s32.totalorder %s11, 3
    %p265 = pnand %p263, %p264
    %p266 = pneg %p265
    // Predicated region
    $region37: #{conv_bn_forward.1} parent=5 // pred_check
      _
    $region38: #{conv_bn_forward.1} parent=5 // pred_check_branch
      %268 = sbr.rel (%p265) target = $region40
    $region39: #{conv_bn_forward.1} parent=5 // pred_region
      %s269 = ssub.s32 %s11, 1
      %s270 = ssub.s32 1, %s22
      %s271 = smul.u32 %s23, %s270
      %s272 = smul.u32 7, %s271
      %p273 = scmp.lt.s32.totalorder %s272, 6
      %s274 = scalar_select %p273, %s272, 6
      %s275 = smul.addr %s274, 2
      %s276 = scalar_lea.vmem %s0, %s275
      %p277 = pneg %p60
      %p278 = pneg %p57
      %p279 = scmp.lt.s32.totalorder %s21, 0
      %s280 = scalar_select %p279, %s21, 0
      %s281 = smul.addr %s280, 4
      %s282 = scalar_lea.vmem %s1, %s281
      %p283 = pneg %p86
      %p284 = pneg %p83
      %p285 = scmp.lt.s32.totalorder %s21, 0
      %s286 = scalar_select %p285, %s21, 0
      %s287 = smul.addr %s286, 8
      %s288 = scalar_lea.vmem %s2, %s287
      %p289 = pneg %p112
      %p290 = pneg %p109
      %p291 = scmp.lt.s32.totalorder %s21, 0
      %s292 = scalar_select %p291, %s21, 0
      %s293 = smul.addr %s292, 8
      %s294 = scalar_lea.vmem %s3, %s293
      %p295 = pneg %p138
      %p296 = pneg %p135
      %s297 = ssub.s32 1, %s22
      %s298 = smul.u32 %s23, %s297
      %s299 = smul.u32 6, %s298
      %p300 = scmp.lt.s32.totalorder %s299, 5
      %s301 = scalar_select %p300, %s299, 5
      %s302 = scalar_lea.vmem %s4, %s301
      %p303 = pneg %p168
      %p304 = pneg %p165
      %p305 = pneg %p198
      %p306 = pneg %p195
      %s307 = smul.u32 %s22, %s23
      %s308 = smul.u32 6, %s307
      %p309 = scmp.lt.s32.totalorder %s21, 0
      %s310 = scalar_select %p309, %s21, 0
      %p311 = scmp.lt.s32.totalorder %s308, 5
      %s312 = scalar_select %p311, %s308, 5
      %s313 = smul.addr %s310, 6
      %s314 = sadd.s32 %s312, %s313
      %s315 = smul.addr %s314, 8
      %s316 = scalar_lea.vmem %s5, %s315
      %s317 = ssub.s32 1, %s22
      %s318 = smul.u32 %s23, %s317
      %s319 = smul.u32 7, %s318
      %p320 = scmp.lt.s32.totalorder %s319, 6
      %s321 = scalar_select %p320, %s319, 6
      %s322 = smul.addr %s321, 2
      %s323 = scalar_lea.vmem %s0, %s322
      %s324 = ssub.s32 1, %s22
      %s325 = smul.u32 %s23, %s324
      %s326 = smul.u32 7, %s325
      %p327 = scmp.lt.s32.totalorder %s21, 0
      %s328 = scalar_select %p327, %s21, 0
      %s329 = smul.addr %s328, 4
      %s330 = scalar_lea.vmem %s1, %s329
      %p331 = scmp.lt.s32.totalorder %s21, 0
      %s332 = scalar_select %p331, %s21, 0
      %s333 = smul.addr %s332, 8
      %s334 = scalar_lea.vmem %s2, %s333
      %p335 = scmp.lt.s32.totalorder %s21, 0
      %s336 = scalar_select %p335, %s21, 0
      %s337 = smul.addr %s336, 8
      %s338 = scalar_lea.vmem %s3, %s337
      %s339 = ssub.s32 1, %s22
      %s340 = smul.u32 %s23, %s339
      %s341 = smul.u32 6, %s340
      %p342 = scmp.lt.s32.totalorder %s341, 5
      %s343 = scalar_select %p342, %s341, 5
      %s344 = scalar_lea.vmem %s4, %s343
      %s345 = ssub.s32 1, %s22
      %s346 = smul.u32 %s23, %s345
      %s347 = smul.u32 6, %s346
      %s348 = smul.u32 %s22, %s23
      %s349 = smul.u32 6, %s348
      %p350 = scmp.lt.s32.totalorder %s21, 0
      %s351 = scalar_select %p350, %s21, 0
      %p352 = scmp.lt.s32.totalorder %s349, 5
      %s353 = scalar_select %p352, %s349, 5
      %s354 = smul.addr %s351, 6
      %s355 = sadd.s32 %s353, %s354
      %s356 = smul.addr %s355, 8
      %s357 = scalar_lea.vmem %s5, %s356
      %s358 = smul.u32 %s22, %s23
      %s359 = smul.u32 6, %s358
      %p361 = scmp.eq.s32.totalorder %s22, 0
      %p362 = scmp.eq.s32.totalorder %s23, 0
      %p363 = pnand %p361, %p362
      %p364 = pneg %p363
      // Predicated region
      $region41: #{conv_bn_forward.1} parent=39 // pred_check
        _
      $region42: #{conv_bn_forward.1} parent=39 // pred_check_branch
        %366 = sbr.rel (%p363) target = $region44
      $region43: #{conv_bn_forward.1} parent=39 // pred_region
        %vm367 = vcmask 7168
        %368 = vst.msk [vmem:[#allocation3] sm:$0xff] %vm367, 0.0
        %369 = vst.msk [vmem:[#allocation4] sm:$0xff] %vm367, 0.0
        %vm370 = vcmask 0
        %371 = vst.msk [vmem:[#allocation5] sm:$0x1] %vm370, 0.0
      $region44: #{conv_bn_forward.1} parent=39 // pred_fallthru
        _
      // Predicated region
      $region45: #{conv_bn_forward.1} parent=39 // pred_check
        %p372 = pneg %p361
      $region46: #{conv_bn_forward.1} parent=39 // pred_check_branch
        %374 = sbr.rel (%p372) target = $region48
      $region47: #{conv_bn_forward.1} parent=39 // pred_region
        %v375 = vld [vmem:[%s323] sm:$0xff]
        %v376 = vld [vmem:[%s323 + $0x8] sm:$0x3f]
        %v377 = vld [vmem:[%s330] sm:$0xf]
        %s378 = scalar_lea.vmem %s330, 4
        %v379 = vld [vmem:[%s378] sm:$0xf]
        %v382 = vcombine.high %v375, %v375
        %v384 = vunpack.c.l.s4 1983009808
        %v385 = vunpack.c.0.s8 %v384
        %v386 = vlaneseq
        %v387 = vshrl.u32 %v386, 7
        %v388 = vsub.s32 %v385, %v387
        %v389 = vrot.slane %v375, %v388
        %v391 = vunpack.c.l.s4 1983009808
        %v392 = vunpack.c.0.s8 %v391
        %v393 = vlaneseq
        %v394 = vshrl.u32 %v393, 7
        %v395 = vsub.s32 %v392, %v394
        %v396 = vrot.slane %v382, %v395
        %v397 = vcombine.high %v389, %v389
        %v398 = vcombine.high %v396, %v396
        %v399 = vcombine.high %v376, %v376
        %v401 = vunpack.c.l.s4 1983009808
        %v402 = vunpack.c.0.s8 %v401
        %v403 = vlaneseq
        %v404 = vshrl.u32 %v403, 7
        %v405 = vsub.s32 %v402, %v404
        %v406 = vrot.slane %v376, %v405
        %v408 = vunpack.c.l.s4 1983009808
        %v409 = vunpack.c.0.s8 %v408
        %v410 = vlaneseq
        %v411 = vshrl.u32 %v410, 7
        %v412 = vsub.s32 %v409, %v411
        %v413 = vrot.slane %v399, %v412
        %v414 = vcombine.high %v406, %v406
        %415 = vrot.lane.b32.xlu0 %v389, 127
        %v416 = vpop.permute.xlu0 %415
        %417 = vrot.lane.b32.xlu0 %v397, 127
        %v418 = vpop.permute.xlu0 %417
        %419 = vrot.lane.b32.xlu0 %v396, 127
        %v420 = vpop.permute.xlu0 %419
        %421 = vrot.lane.b32.xlu0 %v398, 127
        %v422 = vpop.permute.xlu0 %421
        %423 = vrot.lane.b32.xlu0 %v406, 127
        %v424 = vpop.permute.xlu0 %423
        %425 = vrot.lane.b32.xlu0 %v414, 127
        %v426 = vpop.permute.xlu0 %425
        %427 = vrot.lane.b32.xlu0 %v413, 127
        %v428 = vpop.permute.xlu0 %427
        %vm429 = vcmask 1039360
        %v430 = vsel %vm429, %v416, %v418
        %v431 = vsel %vm429, %v418, %v420
        %v432 = vsel %vm429, %v420, %v422
        %v433 = vsel %vm429, %v422, %v424
        %v434 = vsel %vm429, %v424, %v426
        %v435 = vsel %vm429, %v426, %v428
        %vm436 = vcmask 31744
        %v438 = vsel %vm436, %v379, 0
        %vm440 = vcmask 1041408
        %v442 = vsel %vm440, %v430, 0
        %v445 = vsel %vm440, %v431, 0
        %v448 = vsel %vm440, %v432, 0
        %v451 = vsel %vm440, %v433, 0
        %v454 = vsel %vm440, %v434, 0
        %v457 = vsel %vm440, %v435, 0
        %459 = vmatprep.subr.bf16.mxu0 %v445
        %460 = vmatpush1.bf16.msra.mxu0 %v442
        %461 = vmatprep.subr.bf16.mxu0 0
        %462 = vmatpush1.bf16.msra.mxu0 0
        %463 = vmatprep.subr.bf16.mxu0 0
        %464 = vmatpush1.bf16.msra.mxu0 0
        %465 = vmatprep.subr.bf16.mxu0 0
        %466 = vmatpush1.bf16.msra.mxu0 0
        %467 = vmatprep.subr.bf16.mxu0 0
        %468 = vmatpush1.bf16.msra.mxu0 0
        %469 = vmatprep.subr.bf16.mxu0 0
        %470 = vmatpush1.bf16.msra.mxu0 0
        %471 = vmatprep.subr.bf16.mxu0 0
        %472 = vmatpush1.bf16.msra.mxu0 0
        %473 = vmatprep.subr.bf16.mxu0 0
        %474 = vmatpush1.bf16.msra.mxu0 0
        %475 = vmatprep.subr.bf16.mxu0 0
        %476 = vmatpush1.bf16.msra.mxu0 0
        %477 = vmatprep.subr.bf16.mxu0 0
        %478 = vmatpush1.bf16.msra.mxu0 0
        %479 = vmatprep.subr.bf16.mxu0 0
        %480 = vmatpush1.bf16.msra.mxu0 0
        %481 = vmatprep.subr.bf16.mxu0 0
        %482 = vmatpush1.bf16.msra.mxu0 0
        %483 = vmatprep.subr.bf16.mxu0 0
        %484 = vmatpush1.bf16.msra.mxu0 0
        %485 = vmatprep.subr.bf16.mxu0 0
        %486 = vmatpush1.bf16.msra.mxu0 0
        %487 = vmatprep.subr.bf16.mxu0 0
        %488 = vmatpush1.bf16.msra.mxu0 0
        %489 = vmatprep.subr.bf16.mxu0 0
        %490 = vmatpush1.bf16.msra.mxu0 0
        %491 = vmatprep.mubr.bf16.mxu0 0
        %492 = vmatmul.mubr.bf16.gmra.mrb[0].mxu0 %v438
        %v493 = vpop.f32.mrb[0].mxu0
        %v494 = vadd.f32 0.0, %v493
        %v495 = vpop.f32.mrb[0].mxu0
        %v496 = vadd.f32 0.0, %v495
        %v497 = vpop.f32.mrb[0].mxu0
        %v498 = vpop.f32.mrb[0].mxu0
        %499 = vdwg.mxu0
        %500 = vmatprep.subr.bf16.mxu0 %v451
        %501 = vmatpush1.bf16.msra.mxu0 %v448
        %502 = vmatprep.subr.bf16.mxu0 0
        %503 = vmatpush1.bf16.msra.mxu0 0
        %504 = vmatprep.subr.bf16.mxu0 0
        %505 = vmatpush1.bf16.msra.mxu0 0
        %506 = vmatprep.subr.bf16.mxu0 0
        %507 = vmatpush1.bf16.msra.mxu0 0
        %508 = vmatprep.subr.bf16.mxu0 0
        %509 = vmatpush1.bf16.msra.mxu0 0
        %510 = vmatprep.subr.bf16.mxu0 0
        %511 = vmatpush1.bf16.msra.mxu0 0
        %512 = vmatprep.subr.bf16.mxu0 0
        %513 = vmatpush1.bf16.msra.mxu0 0
        %514 = vmatprep.subr.bf16.mxu0 0
        %515 = vmatpush1.bf16.msra.mxu0 0
        %516 = vmatprep.subr.bf16.mxu0 0
        %517 = vmatpush1.bf16.msra.mxu0 0
        %518 = vmatprep.subr.bf16.mxu0 0
        %519 = vmatpush1.bf16.msra.mxu0 0
        %520 = vmatprep.subr.bf16.mxu0 0
        %521 = vmatpush1.bf16.msra.mxu0 0
        %522 = vmatprep.subr.bf16.mxu0 0
        %523 = vmatpush1.bf16.msra.mxu0 0
        %524 = vmatprep.subr.bf16.mxu0 0
        %525 = vmatpush1.bf16.msra.mxu0 0
        %526 = vmatprep.subr.bf16.mxu0 0
        %527 = vmatpush1.bf16.msra.mxu0 0
        %528 = vmatprep.subr.bf16.mxu0 0
        %529 = vmatpush1.bf16.msra.mxu0 0
        %530 = vmatprep.subr.bf16.mxu0 0
        %531 = vmatpush1.bf16.msra.mxu0 0
        %532 = vmatprep.mubr.bf16.mxu0 0
        %533 = vmatmul.mubr.bf16.gmra.mrb[0].mxu0 %v438
        %v534 = vpop.f32.mrb[0].mxu0
        %v535 = vadd.f32 0.0, %v534
        %v536 = vpop.f32.mrb[0].mxu0
        %v537 = vadd.f32 0.0, %v536
        %v538 = vpop.f32.mrb[0].mxu0
        %v539 = vpop.f32.mrb[0].mxu0
        %540 = vdwg.mxu0
        %541 = vmatprep.subr.bf16.mxu0 %v457
        %542 = vmatpush1.bf16.msra.mxu0 %v454
        %543 = vmatprep.subr.bf16.mxu0 0
        %544 = vmatpush1.bf16.msra.mxu0 0
        %545 = vmatprep.subr.bf16.mxu0 0
        %546 = vmatpush1.bf16.msra.mxu0 0
        %547 = vmatprep.subr.bf16.mxu0 0
        %548 = vmatpush1.bf16.msra.mxu0 0
        %549 = vmatprep.subr.bf16.mxu0 0
        %550 = vmatpush1.bf16.msra.mxu0 0
        %551 = vmatprep.subr.bf16.mxu0 0
        %552 = vmatpush1.bf16.msra.mxu0 0
        %553 = vmatprep.subr.bf16.mxu0 0
        %554 = vmatpush1.bf16.msra.mxu0 0
        %555 = vmatprep.subr.bf16.mxu0 0
        %556 = vmatpush1.bf16.msra.mxu0 0
        %557 = vmatprep.subr.bf16.mxu0 0
        %558 = vmatpush1.bf16.msra.mxu0 0
        %559 = vmatprep.subr.bf16.mxu0 0
        %560 = vmatpush1.bf16.msra.mxu0 0
        %561 = vmatprep.subr.bf16.mxu0 0
        %562 = vmatpush1.bf16.msra.mxu0 0
        %563 = vmatprep.subr.bf16.mxu0 0
        %564 = vmatpush1.bf16.msra.mxu0 0
        %565 = vmatprep.subr.bf16.mxu0 0
        %566 = vmatpush1.bf16.msra.mxu0 0
        %567 = vmatprep.subr.bf16.mxu0 0
        %568 = vmatpush1.bf16.msra.mxu0 0
        %569 = vmatprep.subr.bf16.mxu0 0
        %570 = vmatpush1.bf16.msra.mxu0 0
        %571 = vmatprep.subr.bf16.mxu0 0
        %572 = vmatpush1.bf16.msra.mxu0 0
        %573 = vmatprep.mubr.bf16.mxu0 0
        %574 = vmatmul.mubr.bf16.gmra.mrb[0].mxu0 %v438
        %v575 = vpop.f32.mrb[0].mxu0
        %v576 = vadd.f32 0.0, %v575
        %v577 = vpop.f32.mrb[0].mxu0
        %v578 = vadd.f32 0.0, %v577
        %v579 = vpop.f32.mrb[0].mxu0
        %v580 = vpop.f32.mrb[0].mxu0
        %581 = vdwg.mxu0
        %v583 = vsel %vm436, %v377, 0
        %v586 = vsel %vm440, %v389, 0
        %v589 = vsel %vm440, %v397, 0
        %v592 = vsel %vm440, %v396, 0
        %v595 = vsel %vm440, %v398, 0
        %v598 = vsel %vm440, %v406, 0
        %v601 = vsel %vm440, %v414, 0
        %603 = vmatprep.subr.bf16.mxu0 %v589
        %604 = vmatpush1.bf16.msra.mxu0 %v586
        %605 = vmatprep.subr.bf16.mxu0 0
        %606 = vmatpush1.bf16.msra.mxu0 0
        %607 = vmatprep.subr.bf16.mxu0 0
        %608 = vmatpush1.bf16.msra.mxu0 0
        %609 = vmatprep.subr.bf16.mxu0 0
        %610 = vmatpush1.bf16.msra.mxu0 0
        %611 = vmatprep.subr.bf16.mxu0 0
        %612 = vmatpush1.bf16.msra.mxu0 0
        %613 = vmatprep.subr.bf16.mxu0 0
        %614 = vmatpush1.bf16.msra.mxu0 0
        %615 = vmatprep.subr.bf16.mxu0 0
        %616 = vmatpush1.bf16.msra.mxu0 0
        %617 = vmatprep.subr.bf16.mxu0 0
        %618 = vmatpush1.bf16.msra.mxu0 0
        %619 = vmatprep.subr.bf16.mxu0 0
        %620 = vmatpush1.bf16.msra.mxu0 0
        %621 = vmatprep.subr.bf16.mxu0 0
        %622 = vmatpush1.bf16.msra.mxu0 0
        %623 = vmatprep.subr.bf16.mxu0 0
        %624 = vmatpush1.bf16.msra.mxu0 0
        %625 = vmatprep.subr.bf16.mxu0 0
        %626 = vmatpush1.bf16.msra.mxu0 0
        %627 = vmatprep.subr.bf16.mxu0 0
        %628 = vmatpush1.bf16.msra.mxu0 0
        %629 = vmatprep.subr.bf16.mxu0 0
        %630 = vmatpush1.bf16.msra.mxu0 0
        %631 = vmatprep.subr.bf16.mxu0 0
        %632 = vmatpush1.bf16.msra.mxu0 0
        %633 = vmatprep.subr.bf16.mxu0 0
        %634 = vmatpush1.bf16.msra.mxu0 0
        %635 = vmatprep.mubr.bf16.mxu0 0
        %636 = vmatmul.mubr.bf16.gmra.mrb[0].mxu0 %v583
        %v637 = vpop.f32.mrb[0].mxu0
        %v638 = vadd.f32 %v494, %v637
        %v639 = vpop.f32.mrb[0].mxu0
        %v640 = vadd.f32 %v496, %v639
        %v641 = vpop.f32.mrb[0].mxu0
        %v642 = vpop.f32.mrb[0].mxu0
        %643 = vdwg.mxu0
        %644 = vmatprep.subr.bf16.mxu0 %v595
        %645 = vmatpush1.bf16.msra.mxu0 %v592
        %646 = vmatprep.subr.bf16.mxu0 0
        %647 = vmatpush1.bf16.msra.mxu0 0
        %648 = vmatprep.subr.bf16.mxu0 0
        %649 = vmatpush1.bf16.msra.mxu0 0
        %650 = vmatprep.subr.bf16.mxu0 0
        %651 = vmatpush1.bf16.msra.mxu0 0
        %652 = vmatprep.subr.bf16.mxu0 0
        %653 = vmatpush1.bf16.msra.mxu0 0
        %654 = vmatprep.subr.bf16.mxu0 0
        %655 = vmatpush1.bf16.msra.mxu0 0
        %656 = vmatprep.subr.bf16.mxu0 0
        %657 = vmatpush1.bf16.msra.mxu0 0
        %658 = vmatprep.subr.bf16.mxu0 0
        %659 = vmatpush1.bf16.msra.mxu0 0
        %660 = vmatprep.subr.bf16.mxu0 0
        %661 = vmatpush1.bf16.msra.mxu0 0
        %662 = vmatprep.subr.bf16.mxu0 0
        %663 = vmatpush1.bf16.msra.mxu0 0
        %664 = vmatprep.subr.bf16.mxu0 0
        %665 = vmatpush1.bf16.msra.mxu0 0
        %666 = vmatprep.subr.bf16.mxu0 0
        %667 = vmatpush1.bf16.msra.mxu0 0
        %668 = vmatprep.subr.bf16.mxu0 0
        %669 = vmatpush1.bf16.msra.mxu0 0
        %670 = vmatprep.subr.bf16.mxu0 0
        %671 = vmatpush1.bf16.msra.mxu0 0
        %672 = vmatprep.subr.bf16.mxu0 0
        %673 = vmatpush1.bf16.msra.mxu0 0
        %674 = vmatprep.subr.bf16.mxu0 0
        %675 = vmatpush1.bf16.msra.mxu0 0
        %676 = vmatprep.mubr.bf16.mxu0 0
        %677 = vmatmul.mubr.bf16.gmra.mrb[0].mxu0 %v583
        %v678 = vpop.f32.mrb[0].mxu0
        %v679 = vadd.f32 %v535, %v678
        %v680 = vpop.f32.mrb[0].mxu0
        %v681 = vadd.f32 %v537, %v680
        %v682 = vpop.f32.mrb[0].mxu0
        %v683 = vpop.f32.mrb[0].mxu0
        %684 = vdwg.mxu0
        %685 = vmatprep.subr.bf16.mxu0 %v601
        %686 = vmatpush1.bf16.msra.mxu0 %v598
        %687 = vmatprep.subr.bf16.mxu0 0
        %688 = vmatpush1.bf16.msra.mxu0 0
        %689 = vmatprep.subr.bf16.mxu0 0
        %690 = vmatpush1.bf16.msra.mxu0 0
        %691 = vmatprep.subr.bf16.mxu0 0
        %692 = vmatpush1.bf16.msra.mxu0 0
        %693 = vmatprep.subr.bf16.mxu0 0
        %694 = vmatpush1.bf16.msra.mxu0 0
        %695 = vmatprep.subr.bf16.mxu0 0
        %696 = vmatpush1.bf16.msra.mxu0 0
        %697 = vmatprep.subr.bf16.mxu0 0
        %698 = vmatpush1.bf16.msra.mxu0 0
        %699 = vmatprep.subr.bf16.mxu0 0
        %700 = vmatpush1.bf16.msra.mxu0 0
        %701 = vmatprep.subr.bf16.mxu0 0
        %702 = vmatpush1.bf16.msra.mxu0 0
        %703 = vmatprep.subr.bf16.mxu0 0
        %704 = vmatpush1.bf16.msra.mxu0 0
        %705 = vmatprep.subr.bf16.mxu0 0
        %706 = vmatpush1.bf16.msra.mxu0 0
        %707 = vmatprep.subr.bf16.mxu0 0
        %708 = vmatpush1.bf16.msra.mxu0 0
        %709 = vmatprep.subr.bf16.mxu0 0
        %710 = vmatpush1.bf16.msra.mxu0 0
        %711 = vmatprep.subr.bf16.mxu0 0
        %712 = vmatpush1.bf16.msra.mxu0 0
        %713 = vmatprep.subr.bf16.mxu0 0
        %714 = vmatpush1.bf16.msra.mxu0 0
        %715 = vmatprep.subr.bf16.mxu0 0
        %716 = vmatpush1.bf16.msra.mxu0 0
        %717 = vmatprep.mubr.bf16.mxu0 0
        %718 = vmatmul.mubr.bf16.gmra.mrb[0].mxu0 %v583
        %v719 = vpop.f32.mrb[0].mxu0
        %v720 = vadd.f32 %v576, %v719
        %v721 = vpop.f32.mrb[0].mxu0
        %v722 = vadd.f32 %v578, %v721
        %v723 = vpop.f32.mrb[0].mxu0
        %v724 = vpop.f32.mrb[0].mxu0
        %725 = vdwg.mxu0
        %s726 = scalar_lea.vmem %s330, 8
        %v727 = vld [vmem:[%s726] sm:$0xf]
        %728 = vrot.lane.b32.xlu0 %v389, 126
        %v729 = vpop.permute.xlu0 %728
        %730 = vrot.lane.b32.xlu0 %v397, 126
        %v731 = vpop.permute.xlu0 %730
        %732 = vrot.lane.b32.xlu0 %v396, 126
        %v733 = vpop.permute.xlu0 %732
        %734 = vrot.lane.b32.xlu0 %v398, 126
        %v735 = vpop.permute.xlu0 %734
        %736 = vrot.lane.b32.xlu0 %v406, 126
        %v737 = vpop.permute.xlu0 %736
        %738 = vrot.lane.b32.xlu0 %v414, 126
        %v739 = vpop.permute.xlu0 %738
        %740 = vrot.lane.b32.xlu0 %v413, 126
        %v741 = vpop.permute.xlu0 %740
        %vm742 = vcmask 1031168
        %v743 = vsel %vm742, %v729, %v731
        %v744 = vsel %vm742, %v731, %v733
        %v745 = vsel %vm742, %v733, %v735
        %v746 = vsel %vm742, %v735, %v737
        %v747 = vsel %vm742, %v737, %v739
        %v748 = vsel %vm742, %v739, %v741
        %v750 = vsel %vm436, %v727, 0
        %v753 = vsel %vm440, %v743, 0
        %v756 = vsel %vm440, %v744, 0
        %v759 = vsel %vm440, %v745, 0
        %v762 = vsel %vm440, %v746, 0
        %v765 = vsel %vm440, %v747, 0
        %v768 = vsel %vm440, %v748, 0
        %770 = vmatprep.subr.bf16.mxu0 %v756
        %771 = vmatpush1.bf16.msra.mxu0 %v753
        %772 = vmatprep.subr.bf16.mxu0 0
        %773 = vmatpush1.bf16.msra.mxu0 0
        %774 = vmatprep.subr.bf16.mxu0 0
        %775 = vmatpush1.bf16.msra.mxu0 0
        %776 = vmatprep.subr.bf16.mxu0 0
        %777 = vmatpush1.bf16.msra.mxu0 0
        %778 = vmatprep.subr.bf16.mxu0 0
        %779 = vmatpush1.bf16.msra.mxu0 0
        %780 = vmatprep.subr.bf16.mxu0 0
        %781 = vmatpush1.bf16.msra.mxu0 0
        %782 = vmatprep.subr.bf16.mxu0 0
        %783 = vmatpush1.bf16.msra.mxu0 0
        %784 = vmatprep.subr.bf16.mxu0 0
        %785 = vmatpush1.bf16.msra.mxu0 0
        %786 = vmatprep.subr.bf16.mxu0 0
        %787 = vmatpush1.bf16.msra.mxu0 0
        %788 = vmatprep.subr.bf16.mxu0 0
        %789 = vmatpush1.bf16.msra.mxu0 0
        %790 = vmatprep.subr.bf16.mxu0 0
        %791 = vmatpush1.bf16.msra.mxu0 0
        %792 = vmatprep.subr.bf16.mxu0 0
        %793 = vmatpush1.bf16.msra.mxu0 0
        %794 = vmatprep.subr.bf16.mxu0 0
        %795 = vmatpush1.bf16.msra.mxu0 0
        %796 = vmatprep.subr.bf16.mxu0 0
        %797 = vmatpush1.bf16.msra.mxu0 0
        %798 = vmatprep.subr.bf16.mxu0 0
        %799 = vmatpush1.bf16.msra.mxu0 0
        %800 = vmatprep.subr.bf16.mxu0 0
        %801 = vmatpush1.bf16.msra.mxu0 0
        %802 = vmatprep.mubr.bf16.mxu0 0
        %803 = vmatmul.mubr.bf16.gmra.mrb[0].mxu0 %v750
        %v804 = vpop.f32.mrb[0].mxu0
        %v805 = vadd.f32 0.0, %v804
        %v806 = vpop.f32.mrb[0].mxu0
        %v807 = vadd.f32 0.0, %v806
        %v808 = vpop.f32.mrb[0].mxu0
        %v809 = vpop.f32.mrb[0].mxu0
        %810 = vdwg.mxu0
        %811 = vmatprep.subr.bf16.mxu0 %v762
        %812 = vmatpush1.bf16.msra.mxu0 %v759
        %813 = vmatprep.subr.bf16.mxu0 0
        %814 = vmatpush1.bf16.msra.mxu0 0
        %815 = vmatprep.subr.bf16.mxu0 0
        %816 = vmatpush1.bf16.msra.mxu0 0
        %817 = vmatprep.subr.bf16.mxu0 0
        %818 = vmatpush1.bf16.msra.mxu0 0
        %819 = vmatprep.subr.bf16.mxu0 0
        %820 = vmatpush1.bf16.msra.mxu0 0
        %821 = vmatprep.subr.bf16.mxu0 0
        %822 = vmatpush1.bf16.msra.mxu0 0
        %823 = vmatprep.subr.bf16.mxu0 0
        %824 = vmatpush1.bf16.msra.mxu0 0
        %825 = vmatprep.subr.bf16.mxu0 0
        %826 = vmatpush1.bf16.msra.mxu0 0
        %827 = vmatprep.subr.bf16.mxu0 0
        %828 = vmatpush1.bf16.msra.mxu0 0
        %829 = vmatprep.subr.bf16.mxu0 0
        %830 = vmatpush1.bf16.msra.mxu0 0
        %831 = vmatprep.subr.bf16.mxu0 0
        %832 = vmatpush1.bf16.msra.mxu0 0
        %833 = vmatprep.subr.bf16.mxu0 0
        %834 = vmatpush1.bf16.msra.mxu0 0
        %835 = vmatprep.subr.bf16.mxu0 0
        %836 = vmatpush1.bf16.msra.mxu0 0
        %837 = vmatprep.subr.bf16.mxu0 0
        %838 = vmatpush1.bf16.msra.mxu0 0
        %839 = vmatprep.subr.bf16.mxu0 0
        %840 = vmatpush1.bf16.msra.mxu0 0
        %841 = vmatprep.subr.bf16.mxu0 0
        %842 = vmatpush1.bf16.msra.mxu0 0
        %843 = vmatprep.mubr.bf16.mxu0 0
        %844 = vmatmul.mubr.bf16.gmra.mrb[0].mxu0 %v750
        %v845 = vpop.f32.mrb[0].mxu0
        %v846 = vadd.f32 0.0, %v845
        %v847 = vpop.f32.mrb[0].mxu0
        %v848 = vadd.f32 0.0, %v847
        %v849 = vpop.f32.mrb[0].mxu0
        %v850 = vpop.f32.mrb[0].mxu0
        %851 = vdwg.mxu0
        %852 = vmatprep.subr.bf16.mxu0 %v768
        %853 = vmatpush1.bf16.msra.mxu0 %v765
        %854 = vmatprep.subr.bf16.mxu0 0
        %855 = vmatpush1.bf16.msra.mxu0 0
        %856 = vmatprep.subr.bf16.mxu0 0
        %857 = vmatpush1.bf16.msra.mxu0 0
        %858 = vmatprep.subr.bf16.mxu0 0
        %859 = vmatpush1.bf16.msra.mxu0 0
        %860 = vmatprep.subr.bf16.mxu0 0
        %861 = vmatpush1.bf16.msra.mxu0 0
        %862 = vmatprep.subr.bf16.mxu0 0
        %863 = vmatpush1.bf16.msra.mxu0 0
        %864 = vmatprep.subr.bf16.mxu0 0
        %865 = vmatpush1.bf16.msra.mxu0 0
        %866 = vmatprep.subr.bf16.mxu0 0
        %867 = vmatpush1.bf16.msra.mxu0 0
        %868 = vmatprep.subr.bf16.mxu0 0
        %869 = vmatpush1.bf16.msra.mxu0 0
        %870 = vmatprep.subr.bf16.mxu0 0
        %871 = vmatpush1.bf16.msra.mxu0 0
        %872 = vmatprep.subr.bf16.mxu0 0
        %873 = vmatpush1.bf16.msra.mxu0 0
        %874 = vmatprep.subr.bf16.mxu0 0
        %875 = vmatpush1.bf16.msra.mxu0 0
        %876 = vmatprep.subr.bf16.mxu0 0
        %877 = vmatpush1.bf16.msra.mxu0 0
        %878 = vmatprep.subr.bf16.mxu0 0
        %879 = vmatpush1.bf16.msra.mxu0 0
        %880 = vmatprep.subr.bf16.mxu0 0
        %881 = vmatpush1.bf16.msra.mxu0 0
        %882 = vmatprep.subr.bf16.mxu0 0
        %883 = vmatpush1.bf16.msra.mxu0 0
        %884 = vmatprep.mubr.bf16.mxu0 0
        %885 = vmatmul.mubr.bf16.gmra.mrb[0].mxu0 %v750
        %v886 = vpop.f32.mrb[0].mxu0
        %v887 = vadd.f32 0.0, %v886
        %v888 = vpop.f32.mrb[0].mxu0
        %v889 = vadd.f32 0.0, %v888
        %v890 = vpop.f32.mrb[0].mxu0
        %v891 = vpop.f32.mrb[0].mxu0
        %892 = vdwg.mxu0
        %v893 = vadd.f32 %v638, %v805
        %v894 = vadd.f32 %v640, %v807
        %v895 = vadd.f32 %v679, %v846
        %v896 = vadd.f32 %v681, %v848
        %v897 = vadd.f32 %v720, %v887
        %v898 = vadd.f32 %v722, %v889
        %s899 = scalar_lea.vmem %s330, 12
        %v900 = vld [vmem:[%s899] sm:$0xf]
        %901 = vrot.lane.b32.xlu0 %v389, 110
        %v902 = vpop.permute.xlu0 %901
        %903 = vrot.lane.b32.xlu0 %v397, 110
        %v904 = vpop.permute.xlu0 %903
        %905 = vrot.lane.b32.xlu0 %v396, 110
        %v906 = vpop.permute.xlu0 %905
        %907 = vrot.lane.b32.xlu0 %v398, 110
        %v908 = vpop.permute.xlu0 %907
        %909 = vrot.lane.b32.xlu0 %v406, 110
        %v910 = vpop.permute.xlu0 %909
        %911 = vrot.lane.b32.xlu0 %v414, 110
        %v912 = vpop.permute.xlu0 %911
        %913 = vrot.lane.b32.xlu0 %v413, 110
        %v914 = vpop.permute.xlu0 %913
        %vm915 = vcmask 900096
        %v916 = vsel %vm915, %v902, %v904
        %v917 = vsel %vm915, %v904, %v906
        %v918 = vsel %vm915, %v906, %v908
        %v919 = vsel %vm915, %v908, %v910
        %v920 = vsel %vm915, %v910, %v912
        %v921 = vsel %vm915, %v912, %v914
        %v923 = vsel %vm436, %v900, 0
        %v926 = vsel %vm440, %v916, 0
        %v929 = vsel %vm440, %v917, 0
        %v932 = vsel %vm440, %v918, 0
        %v935 = vsel %vm440, %v919, 0
        %v938 = vsel %vm440, %v920, 0
        %v941 = vsel %vm440, %v921, 0
        %943 = vmatprep.subr.bf16.mxu0 %v929
        %944 = vmatpush1.bf16.msra.mxu0 %v926
        %945 = vmatprep.subr.bf16.mxu0 0
        %946 = vmatpush1.bf16.msra.mxu0 0
        %947 = vmatprep.subr.bf16.mxu0 0
        %948 = vmatpush1.bf16.msra.mxu0 0
        %949 = vmatprep.subr.bf16.mxu0 0
        %950 = vmatpush1.bf16.msra.mxu0 0
        %951 = vmatprep.subr.bf16.mxu0 0
        %952 = vmatpush1.bf16.msra.mxu0 0
        %953 = vmatprep.subr.bf16.mxu0 0
        %954 = vmatpush1.bf16.msra.mxu0 0
        %955 = vmatprep.subr.bf16.mxu0 0
        %956 = vmatpush1.bf16.msra.mxu0 0
        %957 = vmatprep.subr.bf16.mxu0 0
        %958 = vmatpush1.bf16.msra.mxu0 0
        %959 = vmatprep.subr.bf16.mxu0 0
        %960 = vmatpush1.bf16.msra.mxu0 0
        %961 = vmatprep.subr.bf16.mxu0 0
        %962 = vmatpush1.bf16.msra.mxu0 0
        %963 = vmatprep.subr.bf16.mxu0 0
        %964 = vmatpush1.bf16.msra.mxu0 0
        %965 = vmatprep.subr.bf16.mxu0 0
        %966 = vmatpush1.bf16.msra.mxu0 0
        %967 = vmatprep.subr.bf16.mxu0 0
        %968 = vmatpush1.bf16.msra.mxu0 0
        %969 = vmatprep.subr.bf16.mxu0 0
        %970 = vmatpush1.bf16.msra.mxu0 0
        %971 = vmatprep.subr.bf16.mxu0 0
        %972 = vmatpush1.bf16.msra.mxu0 0
        %973 = vmatprep.subr.bf16.mxu0 0
        %974 = vmatpush1.bf16.msra.mxu0 0
        %975 = vmatprep.mubr.bf16.mxu0 0
        %976 = vmatmul.mubr.bf16.gmra.mrb[0].mxu0 %v923
        %v977 = vpop.f32.mrb[0].mxu0
        %v978 = vadd.f32 0.0, %v977
        %v979 = vpop.f32.mrb[0].mxu0
        %v980 = vadd.f32 0.0, %v979
        %v981 = vpop.f32.mrb[0].mxu0
        %v982 = vpop.f32.mrb[0].mxu0
        %983 = vdwg.mxu0
        %984 = vmatprep.subr.bf16.mxu0 %v935
        %985 = vmatpush1.bf16.msra.mxu0 %v932
        %986 = vmatprep.subr.bf16.mxu0 0
        %987 = vmatpush1.bf16.msra.mxu0 0
        %988 = vmatprep.subr.bf16.mxu0 0
        %989 = vmatpush1.bf16.msra.mxu0 0
        %990 = vmatprep.subr.bf16.mxu0 0
        %991 = vmatpush1.bf16.msra.mxu0 0
        %992 = vmatprep.subr.bf16.mxu0 0
        %993 = vmatpush1.bf16.msra.mxu0 0
        %994 = vmatprep.subr.bf16.mxu0 0
        %995 = vmatpush1.bf16.msra.mxu0 0
        %996 = vmatprep.subr.bf16.mxu0 0
        %997 = vmatpush1.bf16.msra.mxu0 0
        %998 = vmatprep.subr.bf16.mxu0 0
        %999 = vmatpush1.bf16.msra.mxu0 0
        %1000 = vmatprep.subr.bf16.mxu0 0
        %1001 = vmatpush1.bf16.msra.mxu0 0
        %1002 = vmatprep.subr.bf16.mxu0 0
        %1003 = vmatpush1.bf16.msra.mxu0 0
        %1004 = vmatprep.subr.bf16.mxu0 0
        %1005 = vmatpush1.bf16.msra.mxu0 0
        %1006 = vmatprep.subr.bf16.mxu0 0
        %1007 = vmatpush1.bf16.msra.mxu0 0
        %1008 = vmatprep.subr.bf16.mxu0 0
        %1009 = vmatpush1.bf16.msra.mxu0 0
        %1010 = vmatprep.subr.bf16.mxu0 0
        %1011 = vmatpush1.bf16.msra.mxu0 0
        %1012 = vmatprep.subr.bf16.mxu0 0
        %1013 = vmatpush1.bf16.msra.mxu0 0
        %1014 = vmatprep.subr.bf16.mxu0 0
        %1015 = vmatpush1.bf16.msra.mxu0 0
        %1016 = vmatprep.mubr.bf16.mxu0 0
        %1017 = vmatmul.mubr.bf16.gmra.mrb[0].mxu0 %v923
        %v1018 = vpop.f32.mrb[0].mxu0
        %v1019 = vadd.f32 0.0, %v1018
        %v1020 = vpop.f32.mrb[0].mxu0
        %v1021 = vadd.f32 0.0, %v1020
        %v1022 = vpop.f32.mrb[0].mxu0
        %v1023 = vpop.f32.mrb[0].mxu0
        %1024 = vdwg.mxu0
        %1025 = vmatprep.subr.bf16.mxu0 %v941
        %1026 = vmatpush1.bf16.msra.mxu0 %v938
        %1027 = vmatprep.subr.bf16.mxu0 0
        %1028 = vmatpush1.bf16.msra.mxu0 0
        %1029 = vmatprep.subr.bf16.mxu0 0
        %1030 = vmatpush1.bf16.msra.mxu0 0
        %1031 = vmatprep.subr.bf16.mxu0 0
        %1032 = vmatpush1.bf16.msra.mxu0 0
        %1033 = vmatprep.subr.bf16.mxu0 0
        %1034 = vmatpush1.bf16.msra.mxu0 0
        %1035 = vmatprep.subr.bf16.mxu0 0
        %1036 = vmatpush1.bf16.msra.mxu0 0
        %1037 = vmatprep.subr.bf16.mxu0 0
        %1038 = vmatpush1.bf16.msra.mxu0 0
        %1039 = vmatprep.subr.bf16.mxu0 0
        %1040 = vmatpush1.bf16.msra.mxu0 0
        %1041 = vmatprep.subr.bf16.mxu0 0
        %1042 = vmatpush1.bf16.msra.mxu0 0
        %1043 = vmatprep.subr.bf16.mxu0 0
        %1044 = vmatpush1.bf16.msra.mxu0 0
        %1045 = vmatprep.subr.bf16.mxu0 0
        %1046 = vmatpush1.bf16.msra.mxu0 0
        %1047 = vmatprep.subr.bf16.mxu0 0
        %1048 = vmatpush1.bf16.msra.mxu0 0
        %1049 = vmatprep.subr.bf16.mxu0 0
        %1050 = vmatpush1.bf16.msra.mxu0 0
        %1051 = vmatprep.subr.bf16.mxu0 0
        %1052 = vmatpush1.bf16.msra.mxu0 0
        %1053 = vmatprep.subr.bf16.mxu0 0
        %1054 = vmatpush1.bf16.msra.mxu0 0
        %1055 = vmatprep.subr.bf16.mxu0 0
        %1056 = vmatpush1.bf16.msra.mxu0 0
        %1057 = vmatprep.mubr.bf16.mxu0 0
        %1058 = vmatmul.mubr.bf16.gmra.mrb[0].mxu0 %v923
        %v1059 = vpop.f32.mrb[0].mxu0
        %v1060 = vadd.f32 0.0, %v1059
        %v1061 = vpop.f32.mrb[0].mxu0
        %v1062 = vadd.f32 0.0, %v1061
        %v1063 = vpop.f32.mrb[0].mxu0
        %v1064 = vpop.f32.mrb[0].mxu0
        %1065 = vdwg.mxu0
        %v1066 = vadd.f32 %v893, %v978
        %v1067 = vadd.f32 %v894, %v980
        %v1068 = vadd.f32 %v895, %v1019
        %v1069 = vadd.f32 %v896, %v1021
        %v1070 = vadd.f32 %v897, %v1060
        %v1071 = vadd.f32 %v898, %v1062
        %s1072 = scalar_lea.vmem %s330, 16
        %v1073 = vld [vmem:[%s1072] sm:$0xf]
        %1074 = vrot.lane.b32.xlu0 %v389, 109
        %v1075 = vpop.permute.xlu0 %1074
        %1076 = vrot.lane.b32.xlu0 %v397, 109
        %v1077 = vpop.permute.xlu0 %1076
        %1078 = vrot.lane.b32.xlu0 %v396, 109
        %v1079 = vpop.permute.xlu0 %1078
        %1080 = vrot.lane.b32.xlu0 %v398, 109
        %v1081 = vpop.permute.xlu0 %1080
        %1082 = vrot.lane.b32.xlu0 %v406, 109
        %v1083 = vpop.permute.xlu0 %1082
        %1084 = vrot.lane.b32.xlu0 %v414, 109
        %v1085 = vpop.permute.xlu0 %1084
        %1086 = vrot.lane.b32.xlu0 %v413, 109
        %v1087 = vpop.permute.xlu0 %1086
        %vm1088 = vcmask 891904
        %v1089 = vsel %vm1088, %v1075, %v1077
        %v1090 = vsel %vm1088, %v1077, %v1079
        %v1091 = vsel %vm1088, %v1079, %v1081
        %v1092 = vsel %vm1088, %v1081, %v1083
        %v1093 = vsel %vm1088, %v1083, %v1085
        %v1094 = vsel %vm1088, %v1085, %v1087
        %v1096 = vsel %vm436, %v1073, 0
        %v1099 = vsel %vm440, %v1089, 0
        %v1102 = vsel %vm440, %v1090, 0
        %v1105 = vsel %vm440, %v1091, 0
        %v1108 = vsel %vm440, %v1092, 0
        %v1111 = vsel %vm440, %v1093, 0
        %v1114 = vsel %vm440, %v1094, 0
        %1116 = vmatprep.subr.bf16.mxu0 %v1102
        %1117 = vmatpush1.bf16.msra.mxu0 %v1099
        %1118 = vmatprep.subr.bf16.mxu0 0
        %1119 = vmatpush1.bf16.msra.mxu0 0
        %1120 = vmatprep.subr.bf16.mxu0 0
        %1121 = vmatpush1.bf16.msra.mxu0 0
        %1122 = vmatprep.subr.bf16.mxu0 0
        %1123 = vmatpush1.bf16.msra.mxu0 0
        %1124 = vmatprep.subr.bf16.mxu0 0
        %1125 = vmatpush1.bf16.msra.mxu0 0
        %1126 = vmatprep.subr.bf16.mxu0 0
        %1127 = vmatpush1.bf16.msra.mxu0 0
        %1128 = vmatprep.subr.bf16.mxu0 0
        %1129 = vmatpush1.bf16.msra.mxu0 0
        %1130 = vmatprep.subr.bf16.mxu0 0
        %1131 = vmatpush1.bf16.msra.mxu0 0
        %1132 = vmatprep.subr.bf16.mxu0 0
        %1133 = vmatpush1.bf16.msra.mxu0 0
        %1134 = vmatprep.subr.bf16.mxu0 0
        %1135 = vmatpush1.bf16.msra.mxu0 0
        %1136 = vmatprep.subr.bf16.mxu0 0
        %1137 = vmatpush1.bf16.msra.mxu0 0
        %1138 = vmatprep.subr.bf16.mxu0 0
        %1139 = vmatpush1.bf16.msra.mxu0 0
        %1140 = vmatprep.subr.bf16.mxu0 0
        %1141 = vmatpush1.bf16.msra.mxu0 0
        %1142 = vmatprep.subr.bf16.mxu0 0
        %1143 = vmatpush1.bf16.msra.mxu0 0
        %1144 = vmatprep.subr.bf16.mxu0 0
        %1145 = vmatpush1.bf16.msra.mxu0 0
        %1146 = vmatprep.subr.bf16.mxu0 0
        %1147 = vmatpush1.bf16.msra.mxu0 0
        %1148 = vmatprep.mubr.bf16.mxu0 0
        %1149 = vmatmul.mubr.bf16.gmra.mrb[0].mxu0 %v1096
        %v1150 = vpop.f32.mrb[0].mxu0
        %v1151 = vadd.f32 0.0, %v1150
        %v1152 = vpop.f32.mrb[0].mxu0
        %v1153 = vadd.f32 0.0, %v1152
        %v1154 = vpop.f32.mrb[0].mxu0
        %v1155 = vpop.f32.mrb[0].mxu0
        %1156 = vdwg.mxu0
        %1157 = vmatprep.subr.bf16.mxu0 %v1108
        %1158 = vmatpush1.bf16.msra.mxu0 %v1105
        %1159 = vmatprep.subr.bf16.mxu0 0
        %1160 = vmatpush1.bf16.msra.mxu0 0
        %1161 = vmatprep.subr.bf16.mxu0 0
        %1162 = vmatpush1.bf16.msra.mxu0 0
        %1163 = vmatprep.subr.bf16.mxu0 0
        %1164 = vmatpush1.bf16.msra.mxu0 0
        %1165 = vmatprep.subr.bf16.mxu0 0
        %1166 = vmatpush1.bf16.msra.mxu0 0
        %1167 = vmatprep.subr.bf16.mxu0 0
        %1168 = vmatpush1.bf16.msra.mxu0 0
        %1169 = vmatprep.subr.bf16.mxu0 0
        %1170 = vmatpush1.bf16.msra.mxu0 0
        %1171 = vmatprep.subr.bf16.mxu0 0
        %1172 = vmatpush1.bf16.msra.mxu0 0
        %1173 = vmatprep.subr.bf16.mxu0 0
        %1174 = vmatpush1.bf16.msra.mxu0 0
        %1175 = vmatprep.subr.bf16.mxu0 0
        %1176 = vmatpush1.bf16.msra.mxu0 0
        %1177 = vmatprep.subr.bf16.mxu0 0
        %1178 = vmatpush1.bf16.msra.mxu0 0
        %1179 = vmatprep.subr.bf16.mxu0 0
        %1180 = vmatpush1.bf16.msra.mxu0 0
        %1181 = vmatprep.subr.bf16.mxu0 0
        %1182 = vmatpush1.bf16.msra.mxu0 0
        %1183 = vmatprep.subr.bf16.mxu0 0
        %1184 = vmatpush1.bf16.msra.mxu0 0
        %1185 = vmatprep.subr.bf16.mxu0 0
        %1186 = vmatpush1.bf16.msra.mxu0 0
        %1187 = vmatprep.subr.bf16.mxu0 0
        %1188 = vmatpush1.bf16.msra.mxu0 0
        %1189 = vmatprep.mubr.bf16.mxu0 0
        %1190 = vmatmul.mubr.bf16.gmra.mrb[0].mxu0 %v1096
        %v1191 = vpop.f32.mrb[0].mxu0
        %v1192 = vadd.f32 0.0, %v1191
        %v1193 = vpop.f32.mrb[0].mxu0
        %v1194 = vadd.f32 0.0, %v1193
        %v1195 = vpop.f32.mrb[0].mxu0
        %v1196 = vpop.f32.mrb[0].mxu0
        %1197 = vdwg.mxu0
        %1198 = vmatprep.subr.bf16.mxu0 %v1114
        %1199 = vmatpush1.bf16.msra.mxu0 %v1111
        %1200 = vmatprep.subr.bf16.mxu0 0
        %1201 = vmatpush1.bf16.msra.mxu0 0
        %1202 = vmatprep.subr.bf16.mxu0 0
        %1203 = vmatpush1.bf16.msra.mxu0 0
        %1204 = vmatprep.subr.bf16.mxu0 0
        %1205 = vmatpush1.bf16.msra.mxu0 0
        %1206 = vmatprep.subr.bf16.mxu0 0
        %1207 = vmatpush1.bf16.msra.mxu0 0
        %1208 = vmatprep.subr.bf16.mxu0 0
        %1209 = vmatpush1.bf16.msra.mxu0 0
        %1210 = vmatprep.subr.bf16.mxu0 0
        %1211 = vmatpush1.bf16.msra.mxu0 0
        %1212 = vmatprep.subr.bf16.mxu0 0
        %1213 = vmatpush1.bf16.msra.mxu0 0
        %1214 = vmatprep.subr.bf16.mxu0 0
        %1215 = vmatpush1.bf16.msra.mxu0 0
        %1216 = vmatprep.subr.bf16.mxu0 0
        %1217 = vmatpush1.bf16.msra.mxu0 0
        %1218 = vmatprep.subr.bf16.mxu0 0
        %1219 = vmatpush1.bf16.msra.mxu0 0
        %1220 = vmatprep.subr.bf16.mxu0 0
        %1221 = vmatpush1.bf16.msra.mxu0 0
        %1222 = vmatprep.subr.bf16.mxu0 0
        %1223 = vmatpush1.bf16.msra.mxu0 0
        %1224 = vmatprep.subr.bf16.mxu0 0
        %1225 = vmatpush1.bf16.msra.mxu0 0
        %1226 = vmatprep.subr.bf16.mxu0 0
        %1227 = vmatpush1.bf16.msra.mxu0 0
        %1228 = vmatprep.subr.bf16.mxu0 0
        %1229 = vmatpush1.bf16.msra.mxu0 0
        %1230 = vmatprep.mubr.bf16.mxu0 0
        %1231 = vmatmul.mubr.bf16.gmra.mrb[0].mxu0 %v1096
        %v1232 = vpop.f32.mrb[0].mxu0
        %v1233 = vadd.f32 0.0, %v1232
        %v1234 = vpop.f32.mrb[0].mxu0
        %v1235 = vadd.f32 0.0, %v1234
        %v1236 = vpop.f32.mrb[0].mxu0
        %v1237 = vpop.f32.mrb[0].mxu0
        %1238 = vdwg.mxu0
        %v1239 = vadd.f32 %v1066, %v1151
        %v1240 = vadd.f32 %v1067, %v1153
        %v1241 = vadd.f32 %v1068, %v1192
        %v1242 = vadd.f32 %v1069, %v1194
        %v1243 = vadd.f32 %v1070, %v1233
        %v1244 = vadd.f32 %v1071, %v1235
        %s1245 = scalar_lea.vmem %s330, 20
        %v1246 = vld [vmem:[%s1245] sm:$0xf]
        %1247 = vrot.lane.b32.xlu0 %v389, 108
        %v1248 = vpop.permute.xlu0 %1247
        %1249 = vrot.lane.b32.xlu0 %v397, 108
        %v1250 = vpop.permute.xlu0 %1249
        %1251 = vrot.lane.b32.xlu0 %v396, 108
        %v1252 = vpop.permute.xlu0 %1251
        %1253 = vrot.lane.b32.xlu0 %v398, 108
        %v1254 = vpop.permute.xlu0 %1253
        %1255 = vrot.lane.b32.xlu0 %v406, 108
        %v1256 = vpop.permute.xlu0 %1255
        %1257 = vrot.lane.b32.xlu0 %v414, 108
        %v1258 = vpop.permute.xlu0 %1257
        %1259 = vrot.lane.b32.xlu0 %v413, 108
        %v1260 = vpop.permute.xlu0 %1259
        %vm1261 = vcmask 883712
        %v1262 = vsel %vm1261, %v1248, %v1250
        %v1263 = vsel %vm1261, %v1250, %v1252
        %v1264 = vsel %vm1261, %v1252, %v1254
        %v1265 = vsel %vm1261, %v1254, %v1256
        %v1266 = vsel %vm1261, %v1256, %v1258
        %v1267 = vsel %vm1261, %v1258, %v1260
        %v1269 = vsel %vm436, %v1246, 0
        %v1272 = vsel %vm440, %v1262, 0
        %v1275 = vsel %vm440, %v1263, 0
        %v1278 = vsel %vm440, %v1264, 0
        %v1281 = vsel %vm440, %v1265, 0
        %v1284 = vsel %vm440, %v1266, 0
        %v1287 = vsel %vm440, %v1267, 0
        %1289 = vmatprep.subr.bf16.mxu0 %v1275
        %1290 = vmatpush1.bf16.msra.mxu0 %v1272
        %1291 = vmatprep.subr.bf16.mxu0 0
        %1292 = vmatpush1.bf16.msra.mxu0 0
        %1293 = vmatprep.subr.bf16.mxu0 0
        %1294 = vmatpush1.bf16.msra.mxu0 0
        %1295 = vmatprep.subr.bf16.mxu0 0
        %1296 = vmatpush1.bf16.msra.mxu0 0
        %1297 = vmatprep.subr.bf16.mxu0 0
        %1298 = vmatpush1.bf16.msra.mxu0 0
        %1299 = vmatprep.subr.bf16.mxu0 0
        %1300 = vmatpush1.bf16.msra.mxu0 0
        %1301 = vmatprep.subr.bf16.mxu0 0
        %1302 = vmatpush1.bf16.msra.mxu0 0
        %1303 = vmatprep.subr.bf16.mxu0 0
        %1304 = vmatpush1.bf16.msra.mxu0 0
        %1305 = vmatprep.subr.bf16.mxu0 0
        %1306 = vmatpush1.bf16.msra.mxu0 0
        %1307 = vmatprep.subr.bf16.mxu0 0
        %1308 = vmatpush1.bf16.msra.mxu0 0
        %1309 = vmatprep.subr.bf16.mxu0 0
        %1310 = vmatpush1.bf16.msra.mxu0 0
        %1311 = vmatprep.subr.bf16.mxu0 0
        %1312 = vmatpush1.bf16.msra.mxu0 0
        %1313 = vmatprep.subr.bf16.mxu0 0
        %1314 = vmatpush1.bf16.msra.mxu0 0
        %1315 = vmatprep.subr.bf16.mxu0 0
        %1316 = vmatpush1.bf16.msra.mxu0 0
        %1317 = vmatprep.subr.bf16.mxu0 0
        %1318 = vmatpush1.bf16.msra.mxu0 0
        %1319 = vmatprep.subr.bf16.mxu0 0
        %1320 = vmatpush1.bf16.msra.mxu0 0
        %1321 = vmatprep.mubr.bf16.mxu0 0
        %1322 = vmatmul.mubr.bf16.gmra.mrb[0].mxu0 %v1269
        %v1323 = vpop.f32.mrb[0].mxu0
        %v1324 = vadd.f32 0.0, %v1323
        %v1325 = vpop.f32.mrb[0].mxu0
        %v1326 = vadd.f32 0.0, %v1325
        %v1327 = vpop.f32.mrb[0].mxu0
        %v1328 = vpop.f32.mrb[0].mxu0
        %1329 = vdwg.mxu0
        %1330 = vmatprep.subr.bf16.mxu0 %v1281
        %1331 = vmatpush1.bf16.msra.mxu0 %v1278
        %1332 = vmatprep.subr.bf16.mxu0 0
        %1333 = vmatpush1.bf16.msra.mxu0 0
        %1334 = vmatprep.subr.bf16.mxu0 0
        %1335 = vmatpush1.bf16.msra.mxu0 0
        %1336 = vmatprep.subr.bf16.mxu0 0
        %1337 = vmatpush1.bf16.msra.mxu0 0
        %1338 = vmatprep.subr.bf16.mxu0 0
        %1339 = vmatpush1.bf16.msra.mxu0 0
        %1340 = vmatprep.subr.bf16.mxu0 0
        %1341 = vmatpush1.bf16.msra.mxu0 0
        %1342 = vmatprep.subr.bf16.mxu0 0
        %1343 = vmatpush1.bf16.msra.mxu0 0
        %1344 = vmatprep.subr.bf16.mxu0 0
        %1345 = vmatpush1.bf16.msra.mxu0 0
        %1346 = vmatprep.subr.bf16.mxu0 0
        %1347 = vmatpush1.bf16.msra.mxu0 0
        %1348 = vmatprep.subr.bf16.mxu0 0
        %1349 = vmatpush1.bf16.msra.mxu0 0
        %1350 = vmatprep.subr.bf16.mxu0 0
        %1351 = vmatpush1.bf16.msra.mxu0 0
        %1352 = vmatprep.subr.bf16.mxu0 0
        %1353 = vmatpush1.bf16.msra.mxu0 0
        %1354 = vmatprep.subr.bf16.mxu0 0
        %1355 = vmatpush1.bf16.msra.mxu0 0
        %1356 = vmatprep.subr.bf16.mxu0 0
        %1357 = vmatpush1.bf16.msra.mxu0 0
        %1358 = vmatprep.subr.bf16.mxu0 0
        %1359 = vmatpush1.bf16.msra.mxu0 0
        %1360 = vmatprep.subr.bf16.mxu0 0
        %1361 = vmatpush1.bf16.msra.mxu0 0
        %1362 = vmatprep.mubr.bf16.mxu0 0
        %1363 = vmatmul.mubr.bf16.gmra.mrb[0].mxu0 %v1269
        %v1364 = vpop.f32.mrb[0].mxu0
        %v1365 = vadd.f32 0.0, %v1364
        %v1366 = vpop.f32.mrb[0].mxu0
        %v1367 = vadd.f32 0.0, %v1366
        %v1368 = vpop.f32.mrb[0].mxu0
        %v1369 = vpop.f32.mrb[0].mxu0
        %1370 = vdwg.mxu0
        %1371 = vmatprep.subr.bf16.mxu0 %v1287
        %1372 = vmatpush1.bf16.msra.mxu0 %v1284
        %1373 = vmatprep.subr.bf16.mxu0 0
        %1374 = vmatpush1.bf16.msra.mxu0 0
        %1375 = vmatprep.subr.bf16.mxu0 0
        %1376 = vmatpush1.bf16.msra.mxu0 0
        %1377 = vmatprep.subr.bf16.mxu0 0
        %1378 = vmatpush1.bf16.msra.mxu0 0
        %1379 = vmatprep.subr.bf16.mxu0 0
        %1380 = vmatpush1.bf16.msra.mxu0 0
        %1381 = vmatprep.subr.bf16.mxu0 0
        %1382 = vmatpush1.bf16.msra.mxu0 0
        %1383 = vmatprep.subr.bf16.mxu0 0
        %1384 = vmatpush1.bf16.msra.mxu0 0
        %1385 = vmatprep.subr.bf16.mxu0 0
        %1386 = vmatpush1.bf16.msra.mxu0 0
        %1387 = vmatprep.subr.bf16.mxu0 0
        %1388 = vmatpush1.bf16.msra.mxu0 0
        %1389 = vmatprep.subr.bf16.mxu0 0
        %1390 = vmatpush1.bf16.msra.mxu0 0
        %1391 = vmatprep.subr.bf16.mxu0 0
        %1392 = vmatpush1.bf16.msra.mxu0 0
        %1393 = vmatprep.subr.bf16.mxu0 0
        %1394 = vmatpush1.bf16.msra.mxu0 0
        %1395 = vmatprep.subr.bf16.mxu0 0
        %1396 = vmatpush1.bf16.msra.mxu0 0
        %1397 = vmatprep.subr.bf16.mxu0 0
        %1398 = vmatpush1.bf16.msra.mxu0 0
        %1399 = vmatprep.subr.bf16.mxu0 0
        %1400 = vmatpush1.bf16.msra.mxu0 0
        %1401 = vmatprep.subr.bf16.mxu0 0
        %1402 = vmatpush1.bf16.msra.mxu0 0
        %1403 = vmatprep.mubr.bf16.mxu0 0
        %1404 = vmatmul.mubr.bf16.gmra.mrb[0].mxu0 %v1269
        %v1405 = vpop.f32.mrb[0].mxu0
        %v1406 = vadd.f32 0.0, %v1405
        %v1407 = vpop.f32.mrb[0].mxu0
        %v1408 = vadd.f32 0.0, %v1407
        %v1409 = vpop.f32.mrb[0].mxu0
        %v1410 = vpop.f32.mrb[0].mxu0
        %1411 = vdwg.mxu0
        %v1412 = vadd.f32 %v1239, %v1324
        %v1413 = vadd.f32 %v1240, %v1326
        %v1414 = vadd.f32 %v1241, %v1365
        %v1415 = vadd.f32 %v1242, %v1367
        %v1416 = vadd.f32 %v1243, %v1406
        %v1417 = vadd.f32 %v1244, %v1408
        %s1418 = scalar_lea.vmem %s330, 24
        %v1419 = vld [vmem:[%s1418] sm:$0xf]
        %1420 = vrot.lane.b32.xlu0 %v389, 92
        %v1421 = vpop.permute.xlu0 %1420
        %1422 = vrot.lane.b32.xlu0 %v397, 92
        %v1423 = vpop.permute.xlu0 %1422
        %1424 = vrot.lane.b32.xlu0 %v396, 92
        %v1425 = vpop.permute.xlu0 %1424
        %1426 = vrot.lane.b32.xlu0 %v398, 92
        %v1427 = vpop.permute.xlu0 %1426
        %1428 = vrot.lane.b32.xlu0 %v406, 92
        %v1429 = vpop.permute.xlu0 %1428
        %1430 = vrot.lane.b32.xlu0 %v414, 92
        %v1431 = vpop.permute.xlu0 %1430
        %1432 = vrot.lane.b32.xlu0 %v413, 92
        %v1433 = vpop.permute.xlu0 %1432
        %vm1434 = vcmask 752640
        %v1435 = vsel %vm1434, %v1421, %v1423
        %v1436 = vsel %vm1434, %v1423, %v1425
        %v1437 = vsel %vm1434, %v1425, %v1427
        %v1438 = vsel %vm1434, %v1427, %v1429
        %v1439 = vsel %vm1434, %v1429, %v1431
        %v1440 = vsel %vm1434, %v1431, %v1433
        %v1442 = vsel %vm436, %v1419, 0
        %v1445 = vsel %vm440, %v1435, 0
        %v1448 = vsel %vm440, %v1436, 0
        %v1451 = vsel %vm440, %v1437, 0
        %v1454 = vsel %vm440, %v1438, 0
        %v1457 = vsel %vm440, %v1439, 0
        %v1460 = vsel %vm440, %v1440, 0
        %1462 = vmatprep.subr.bf16.mxu0 %v1448
        %1463 = vmatpush1.bf16.msra.mxu0 %v1445
        %1464 = vmatprep.subr.bf16.mxu0 0
        %1465 = vmatpush1.bf16.msra.mxu0 0
        %1466 = vmatprep.subr.bf16.mxu0 0
        %1467 = vmatpush1.bf16.msra.mxu0 0
        %1468 = vmatprep.subr.bf16.mxu0 0
        %1469 = vmatpush1.bf16.msra.mxu0 0
        %1470 = vmatprep.subr.bf16.mxu0 0
        %1471 = vmatpush1.bf16.msra.mxu0 0
        %1472 = vmatprep.subr.bf16.mxu0 0
        %1473 = vmatpush1.bf16.msra.mxu0 0
        %1474 = vmatprep.subr.bf16.mxu0 0
        %1475 = vmatpush1.bf16.msra.mxu0 0
        %1476 = vmatprep.subr.bf16.mxu0 0
        %1477 = vmatpush1.bf16.msra.mxu0 0
        %1478 = vmatprep.subr.bf16.mxu0 0
        %1479 = vmatpush1.bf16.msra.mxu0 0
        %1480 = vmatprep.subr.bf16.mxu0 0
        %1481 = vmatpush1.bf16.msra.mxu0 0
        %1482 = vmatprep.subr.bf16.mxu0 0
        %1483 = vmatpush1.bf16.msra.mxu0 0
        %1484 = vmatprep.subr.bf16.mxu0 0
        %1485 = vmatpush1.bf16.msra.mxu0 0
        %1486 = vmatprep.subr.bf16.mxu0 0
        %1487 = vmatpush1.bf16.msra.mxu0 0
        %1488 = vmatprep.subr.bf16.mxu0 0
        %1489 = vmatpush1.bf16.msra.mxu0 0
        %1490 = vmatprep.subr.bf16.mxu0 0
        %1491 = vmatpush1.bf16.msra.mxu0 0
        %1492 = vmatprep.subr.bf16.mxu0 0
        %1493 = vmatpush1.bf16.msra.mxu0 0
        %1494 = vmatprep.mubr.bf16.mxu0 0
        %1495 = vmatmul.mubr.bf16.gmra.mrb[0].mxu0 %v1442
        %v1496 = vpop.f32.mrb[0].mxu0
        %v1497 = vadd.f32 0.0, %v1496
        %v1498 = vpop.f32.mrb[0].mxu0
        %v1499 = vadd.f32 0.0, %v1498
        %v1500 = vpop.f32.mrb[0].mxu0
        %v1501 = vpop.f32.mrb[0].mxu0
        %1502 = vdwg.mxu0
        %1503 = vmatprep.subr.bf16.mxu0 %v1454
        %1504 = vmatpush1.bf16.msra.mxu0 %v1451
        %1505 = vmatprep.subr.bf16.mxu0 0
        %1506 = vmatpush1.bf16.msra.mxu0 0
        %1507 = vmatprep.subr.bf16.mxu0 0
        %1508 = vmatpush1.bf16.msra.mxu0 0
        %1509 = vmatprep.subr.bf16.mxu0 0
        %1510 = vmatpush1.bf16.msra.mxu0 0
        %1511 = vmatprep.subr.bf16.mxu0 0
        %1512 = vmatpush1.bf16.msra.mxu0 0
        %1513 = vmatprep.subr.bf16.mxu0 0
        %1514 = vmatpush1.bf16.msra.mxu0 0
        %1515 = vmatprep.subr.bf16.mxu0 0
        %1516 = vmatpush1.bf16.msra.mxu0 0
        %1517 = vmatprep.subr.bf16.mxu0 0
        %1518 = vmatpush1.bf16.msra.mxu0 0
        %1519 = vmatprep.subr.bf16.mxu0 0
        %1520 = vmatpush1.bf16.msra.mxu0 0
        %1521 = vmatprep.subr.bf16.mxu0 0
        %1522 = vmatpush1.bf16.msra.mxu0 0
        %1523 = vmatprep.subr.bf16.mxu0 0
        %1524 = vmatpush1.bf16.msra.mxu0 0
        %1525 = vmatprep.subr.bf16.mxu0 0
        %1526 = vmatpush1.bf16.msra.mxu0 0
        %1527 = vmatprep.subr.bf16.mxu0 0
        %1528 = vmatpush1.bf16.msra.mxu0 0
        %1529 = vmatprep.subr.bf16.mxu0 0
        %1530 = vmatpush1.bf16.msra.mxu0 0
        %1531 = vmatprep.subr.bf16.mxu0 0
        %1532 = vmatpush1.bf16.msra.mxu0 0
        %1533 = vmatprep.subr.bf16.mxu0 0
        %1534 = vmatpush1.bf16.msra.mxu0 0
        %1535 = vmatprep.mubr.bf16.mxu0 0
        %1536 = vmatmul.mubr.bf16.gmra.mrb[0].mxu0 %v1442
        %v1537 = vpop.f32.mrb[0].mxu0
        %v1538 = vadd.f32 0.0, %v1537
        %v1539 = vpop.f32.mrb[0].mxu0
        %v1540 = vadd.f32 0.0, %v1539
        %v1541 = vpop.f32.mrb[0].mxu0
        %v1542 = vpop.f32.mrb[0].mxu0
        %1543 = vdwg.mxu0
        %1544 = vmatprep.subr.bf16.mxu0 %v1460
        %1545 = vmatpush1.bf16.msra.mxu0 %v1457
        %1546 = vmatprep.subr.bf16.mxu0 0
        %1547 = vmatpush1.bf16.msra.mxu0 0
        %1548 = vmatprep.subr.bf16.mxu0 0
        %1549 = vmatpush1.bf16.msra.mxu0 0
        %1550 = vmatprep.subr.bf16.mxu0 0
        %1551 = vmatpush1.bf16.msra.mxu0 0
        %1552 = vmatprep.subr.bf16.mxu0 0
        %1553 = vmatpush1.bf16.msra.mxu0 0
        %1554 = vmatprep.subr.bf16.mxu0 0
        %1555 = vmatpush1.bf16.msra.mxu0 0
        %1556 = vmatprep.subr.bf16.mxu0 0
        %1557 = vmatpush1.bf16.msra.mxu0 0
        %1558 = vmatprep.subr.bf16.mxu0 0
        %1559 = vmatpush1.bf16.msra.mxu0 0
        %1560 = vmatprep.subr.bf16.mxu0 0
        %1561 = vmatpush1.bf16.msra.mxu0 0
        %1562 = vmatprep.subr.bf16.mxu0 0
        %1563 = vmatpush1.bf16.msra.mxu0 0
        %1564 = vmatprep.subr.bf16.mxu0 0
        %1565 = vmatpush1.bf16.msra.mxu0 0
        %1566 = vmatprep.subr.bf16.mxu0 0
        %1567 = vmatpush1.bf16.msra.mxu0 0
        %1568 = vmatprep.subr.bf16.mxu0 0
        %1569 = vmatpush1.bf16.msra.mxu0 0
        %1570 = vmatprep.subr.bf16.mxu0 0
        %1571 = vmatpush1.bf16.msra.mxu0 0
        %1572 = vmatprep.subr.bf16.mxu0 0
        %1573 = vmatpush1.bf16.msra.mxu0 0
        %1574 = vmatprep.subr.bf16.mxu0 0
        %1575 = vmatpush1.bf16.msra.mxu0 0
        %1576 = vmatprep.mubr.bf16.mxu0 0
        %1577 = vmatmul.mubr.bf16.gmra.mrb[0].mxu0 %v1442
        %v1578 = vpop.f32.mrb[0].mxu0
        %v1579 = vadd.f32 0.0, %v1578
        %v1580 = vpop.f32.mrb[0].mxu0
        %v1581 = vadd.f32 0.0, %v1580
        %v1582 = vpop.f32.mrb[0].mxu0
        %v1583 = vpop.f32.mrb[0].mxu0
        %1584 = vdwg.mxu0
        %v1585 = vadd.f32 %v1412, %v1497
        %v1586 = vadd.f32 %v1413, %v1499
        %v1587 = vadd.f32 %v1414, %v1538
        %v1588 = vadd.f32 %v1415, %v1540
        %v1589 = vadd.f32 %v1416, %v1579
        %v1590 = vadd.f32 %v1417, %v1581
        %s1591 = scalar_lea.vmem %s330, 28
        %v1592 = vld [vmem:[%s1591] sm:$0xf]
        %1593 = vrot.lane.b32.xlu0 %v389, 91
        %v1594 = vpop.permute.xlu0 %1593
        %1595 = vrot.lane.b32.xlu0 %v397, 91
        %v1596 = vpop.permute.xlu0 %1595
        %1597 = vrot.lane.b32.xlu0 %v396, 91
        %v1598 = vpop.permute.xlu0 %1597
        %1599 = vrot.lane.b32.xlu0 %v398, 91
        %v1600 = vpop.permute.xlu0 %1599
        %1601 = vrot.lane.b32.xlu0 %v406, 91
        %v1602 = vpop.permute.xlu0 %1601
        %1603 = vrot.lane.b32.xlu0 %v414, 91
        %v1604 = vpop.permute.xlu0 %1603
        %1605 = vrot.lane.b32.xlu0 %v413, 91
        %v1606 = vpop.permute.xlu0 %1605
        %vm1607 = vcmask 744448
        %v1608 = vsel %vm1607, %v1594, %v1596
        %v1609 = vsel %vm1607, %v1596, %v1598
        %v1610 = vsel %vm1607, %v1598, %v1600
        %v1611 = vsel %vm1607, %v1600, %v1602
        %v1612 = vsel %vm1607, %v1602, %v1604
        %v1613 = vsel %vm1607, %v1604, %v1606
        %v1615 = vsel %vm436, %v1592, 0
        %v1618 = vsel %vm440, %v1608, 0
        %v1621 = vsel %vm440, %v1609, 0
        %v1624 = vsel %vm440, %v1610, 0
        %v1627 = vsel %vm440, %v1611, 0
        %v1630 = vsel %vm440, %v1612, 0
        %v1633 = vsel %vm440, %v1613, 0
        %1635 = vmatprep.subr.bf16.mxu0 %v1621
        %1636 = vmatpush1.bf16.msra.mxu0 %v1618
        %1637 = vmatprep.subr.bf16.mxu0 0
        %1638 = vmatpush1.bf16.msra.mxu0 0
        %1639 = vmatprep.subr.bf16.mxu0 0
        %1640 = vmatpush1.bf16.msra.mxu0 0
        %1641 = vmatprep.subr.bf16.mxu0 0
        %1642 = vmatpush1.bf16.msra.mxu0 0
        %1643 = vmatprep.subr.bf16.mxu0 0
        %1644 = vmatpush1.bf16.msra.mxu0 0
        %1645 = vmatprep.subr.bf16.mxu0 0
        %1646 = vmatpush1.bf16.msra.mxu0 0
        %1647 = vmatprep.subr.bf16.mxu0 0
        %1648 = vmatpush1.bf16.msra.mxu0 0
        %1649 = vmatprep.subr.bf16.mxu0 0
        %1650 = vmatpush1.bf16.msra.mxu0 0
        %1651 = vmatprep.subr.bf16.mxu0 0
        %1652 = vmatpush1.bf16.msra.mxu0 0
        %1653 = vmatprep.subr.bf16.mxu0 0
        %1654 = vmatpush1.bf16.msra.mxu0 0
        %1655 = vmatprep.subr.bf16.mxu0 0
        %1656 = vmatpush1.bf16.msra.mxu0 0
        %1657 = vmatprep.subr.bf16.mxu0 0
        %1658 = vmatpush1.bf16.msra.mxu0 0
        %1659 = vmatprep.subr.bf16.mxu0 0
        %1660 = vmatpush1.bf16.msra.mxu0 0
        %1661 = vmatprep.subr.bf16.mxu0 0
        %1662 = vmatpush1.bf16.msra.mxu0 0
        %1663 = vmatprep.subr.bf16.mxu0 0
        %1664 = vmatpush1.bf16.msra.mxu0 0
        %1665 = vmatprep.subr.bf16.mxu0 0
        %1666 = vmatpush1.bf16.msra.mxu0 0
        %1667 = vmatprep.mubr.bf16.mxu0 0
        %1668 = vmatmul.mubr.bf16.gmra.mrb[0].mxu0 %v1615
        %v1669 = vpop.f32.mrb[0].mxu0
        %v1670 = vadd.f32 0.0, %v1669
        %v1671 = vpop.f32.mrb[0].mxu0
        %v1672 = vadd.f32 0.0, %v1671
        %v1673 = vpop.f32.mrb[0].mxu0
        %v1674 = vpop.f32.mrb[0].mxu0
        %1675 = vdwg.mxu0
        %1676 = vmatprep.subr.bf16.mxu0 %v1627
        %1677 = vmatpush1.bf16.msra.mxu0 %v1624
        %1678 = vmatprep.subr.bf16.mxu0 0
        %1679 = vmatpush1.bf16.msra.mxu0 0
        %1680 = vmatprep.subr.bf16.mxu0 0
        %1681 = vmatpush1.bf16.msra.mxu0 0
        %1682 = vmatprep.subr.bf16.mxu0 0
        %1683 = vmatpush1.bf16.msra.mxu0 0
        %1684 = vmatprep.subr.bf16.mxu0 0
        %1685 = vmatpush1.bf16.msra.mxu0 0
        %1686 = vmatprep.subr.bf16.mxu0 0
        %1687 = vmatpush1.bf16.msra.mxu0 0
        %1688 = vmatprep.subr.bf16.mxu0 0
        %1689 = vmatpush1.bf16.msra.mxu0 0
        %1690 = vmatprep.subr.bf16.mxu0 0
        %1691 = vmatpush1.bf16.msra.mxu0 0
        %1692 = vmatprep.subr.bf16.mxu0 0
        %1693 = vmatpush1.bf16.msra.mxu0 0
        %1694 = vmatprep.subr.bf16.mxu0 0
        %1695 = vmatpush1.bf16.msra.mxu0 0
        %1696 = vmatprep.subr.bf16.mxu0 0
        %1697 = vmatpush1.bf16.msra.mxu0 0
        %1698 = vmatprep.subr.bf16.mxu0 0
        %1699 = vmatpush1.bf16.msra.mxu0 0
        %1700 = vmatprep.subr.bf16.mxu0 0
        %1701 = vmatpush1.bf16.msra.mxu0 0
        %1702 = vmatprep.subr.bf16.mxu0 0
        %1703 = vmatpush1.bf16.msra.mxu0 0
        %1704 = vmatprep.subr.bf16.mxu0 0
        %1705 = vmatpush1.bf16.msra.mxu0 0
        %1706 = vmatprep.subr.bf16.mxu0 0
        %1707 = vmatpush1.bf16.msra.mxu0 0
        %1708 = vmatprep.mubr.bf16.mxu0 0
        %1709 = vmatmul.mubr.bf16.gmra.mrb[0].mxu0 %v1615
        %v1710 = vpop.f32.mrb[0].mxu0
        %v1711 = vadd.f32 0.0, %v1710
        %v1712 = vpop.f32.mrb[0].mxu0
        %v1713 = vadd.f32 0.0, %v1712
        %v1714 = vpop.f32.mrb[0].mxu0
        %v1715 = vpop.f32.mrb[0].mxu0
        %1716 = vdwg.mxu0
        %1717 = vmatprep.subr.bf16.mxu0 %v1633
        %1718 = vmatpush1.bf16.msra.mxu0 %v1630
        %1719 = vmatprep.subr.bf16.mxu0 0
        %1720 = vmatpush1.bf16.msra.mxu0 0
        %1721 = vmatprep.subr.bf16.mxu0 0
        %1722 = vmatpush1.bf16.msra.mxu0 0
        %1723 = vmatprep.subr.bf16.mxu0 0
        %1724 = vmatpush1.bf16.msra.mxu0 0
        %1725 = vmatprep.subr.bf16.mxu0 0
        %1726 = vmatpush1.bf16.msra.mxu0 0
        %1727 = vmatprep.subr.bf16.mxu0 0
        %1728 = vmatpush1.bf16.msra.mxu0 0
        %1729 = vmatprep.subr.bf16.mxu0 0
        %1730 = vmatpush1.bf16.msra.mxu0 0
        %1731 = vmatprep.subr.bf16.mxu0 0
        %1732 = vmatpush1.bf16.msra.mxu0 0
        %1733 = vmatprep.subr.bf16.mxu0 0
        %1734 = vmatpush1.bf16.msra.mxu0 0
        %1735 = vmatprep.subr.bf16.mxu0 0
        %1736 = vmatpush1.bf16.msra.mxu0 0
        %1737 = vmatprep.subr.bf16.mxu0 0
        %1738 = vmatpush1.bf16.msra.mxu0 0
        %1739 = vmatprep.subr.bf16.mxu0 0
        %1740 = vmatpush1.bf16.msra.mxu0 0
        %1741 = vmatprep.subr.bf16.mxu0 0
        %1742 = vmatpush1.bf16.msra.mxu0 0
        %1743 = vmatprep.subr.bf16.mxu0 0
        %1744 = vmatpush1.bf16.msra.mxu0 0
        %1745 = vmatprep.subr.bf16.mxu0 0
        %1746 = vmatpush1.bf16.msra.mxu0 0
        %1747 = vmatprep.subr.bf16.mxu0 0
        %1748 = vmatpush1.bf16.msra.mxu0 0
        %1749 = vmatprep.mubr.bf16.mxu0 0
        %1750 = vmatmul.mubr.bf16.gmra.mrb[0].mxu0 %v1615
        %v1751 = vpop.f32.mrb[0].mxu0
        %v1752 = vadd.f32 0.0, %v1751
        %v1753 = vpop.f32.mrb[0].mxu0
        %v1754 = vadd.f32 0.0, %v1753
        %v1755 = vpop.f32.mrb[0].mxu0
        %v1756 = vpop.f32.mrb[0].mxu0
        %1757 = vdwg.mxu0
        %v1758 = vadd.f32 %v1585, %v1670
        %v1759 = vadd.f32 %v1586, %v1672
        %v1760 = vadd.f32 %v1587, %v1711
        %v1761 = vadd.f32 %v1588, %v1713
        %v1762 = vadd.f32 %v1589, %v1752
        %v1763 = vadd.f32 %v1590, %v1754
        %s1764 = scalar_lea.vmem %s330, 32
        %v1765 = vld [vmem:[%s1764] sm:$0xf]
        %1766 = vrot.lane.b32.xlu0 %v389, 90
        %v1767 = vpop.permute.xlu0 %1766
        %1768 = vrot.lane.b32.xlu0 %v397, 90
        %v1769 = vpop.permute.xlu0 %1768
        %1770 = vrot.lane.b32.xlu0 %v396, 90
        %v1771 = vpop.permute.xlu0 %1770
        %1772 = vrot.lane.b32.xlu0 %v398, 90
        %v1773 = vpop.permute.xlu0 %1772
        %1774 = vrot.lane.b32.xlu0 %v406, 90
        %v1775 = vpop.permute.xlu0 %1774
        %1776 = vrot.lane.b32.xlu0 %v414, 90
        %v1777 = vpop.permute.xlu0 %1776
        %1778 = vrot.lane.b32.xlu0 %v413, 90
        %v1779 = vpop.permute.xlu0 %1778
        %vm1780 = vcmask 736256
        %v1781 = vsel %vm1780, %v1767, %v1769
        %v1782 = vsel %vm1780, %v1769, %v1771
        %v1783 = vsel %vm1780, %v1771, %v1773
        %v1784 = vsel %vm1780, %v1773, %v1775
        %v1785 = vsel %vm1780, %v1775, %v1777
        %v1786 = vsel %vm1780, %v1777, %v1779
        %v1788 = vsel %vm436, %v1765, 0
        %v1791 = vsel %vm440, %v1781, 0
        %v1794 = vsel %vm440, %v1782, 0
        %v1797 = vsel %vm440, %v1783, 0
        %v1800 = vsel %vm440, %v1784, 0
        %v1803 = vsel %vm440, %v1785, 0
        %v1806 = vsel %vm440, %v1786, 0
        %1808 = vmatprep.subr.bf16.mxu0 %v1794
        %1809 = vmatpush1.bf16.msra.mxu0 %v1791
        %1810 = vmatprep.subr.bf16.mxu0 0
        %1811 = vmatpush1.bf16.msra.mxu0 0
        %1812 = vmatprep.subr.bf16.mxu0 0
        %1813 = vmatpush1.bf16.msra.mxu0 0
        %1814 = vmatprep.subr.bf16.mxu0 0
        %1815 = vmatpush1.bf16.msra.mxu0 0
        %1816 = vmatprep.subr.bf16.mxu0 0
        %1817 = vmatpush1.bf16.msra.mxu0 0
        %1818 = vmatprep.subr.bf16.mxu0 0
        %1819 = vmatpush1.bf16.msra.mxu0 0
        %1820 = vmatprep.subr.bf16.mxu0 0
        %1821 = vmatpush1.bf16.msra.mxu0 0
        %1822 = vmatprep.subr.bf16.mxu0 0
        %1823 = vmatpush1.bf16.msra.mxu0 0
        %1824 = vmatprep.subr.bf16.mxu0 0
        %1825 = vmatpush1.bf16.msra.mxu0 0
        %1826 = vmatprep.subr.bf16.mxu0 0
        %1827 = vmatpush1.bf16.msra.mxu0 0
        %1828 = vmatprep.subr.bf16.mxu0 0
        %1829 = vmatpush1.bf16.msra.mxu0 0
        %1830 = vmatprep.subr.bf16.mxu0 0
        %1831 = vmatpush1.bf16.msra.mxu0 0
        %1832 = vmatprep.subr.bf16.mxu0 0
        %1833 = vmatpush1.bf16.msra.mxu0 0
        %1834 = vmatprep.subr.bf16.mxu0 0
        %1835 = vmatpush1.bf16.msra.mxu0 0
        %1836 = vmatprep.subr.bf16.mxu0 0
        %1837 = vmatpush1.bf16.msra.mxu0 0
        %1838 = vmatprep.subr.bf16.mxu0 0
        %1839 = vmatpush1.bf16.msra.mxu0 0
        %1840 = vmatprep.mubr.bf16.mxu0 0
        %1841 = vmatmul.mubr.bf16.gmra.mrb[0].mxu0 %v1788
        %v1842 = vpop.f32.mrb[0].mxu0
        %v1843 = vadd.f32 0.0, %v1842
        %v1844 = vpop.f32.mrb[0].mxu0
        %v1845 = vadd.f32 0.0, %v1844
        %v1846 = vpop.f32.mrb[0].mxu0
        %v1847 = vpop.f32.mrb[0].mxu0
        %1848 = vdwg.mxu0
        %1849 = vmatprep.subr.bf16.mxu0 %v1800
        %1850 = vmatpush1.bf16.msra.mxu0 %v1797
        %1851 = vmatprep.subr.bf16.mxu0 0
        %1852 = vmatpush1.bf16.msra.mxu0 0
        %1853 = vmatprep.subr.bf16.mxu0 0
        %1854 = vmatpush1.bf16.msra.mxu0 0
        %1855 = vmatprep.subr.bf16.mxu0 0
        %1856 = vmatpush1.bf16.msra.mxu0 0
        %1857 = vmatprep.subr.bf16.mxu0 0
        %1858 = vmatpush1.bf16.msra.mxu0 0
        %1859 = vmatprep.subr.bf16.mxu0 0
        %1860 = vmatpush1.bf16.msra.mxu0 0
        %1861 = vmatprep.subr.bf16.mxu0 0
        %1862 = vmatpush1.bf16.msra.mxu0 0
        %1863 = vmatprep.subr.bf16.mxu0 0
        %1864 = vmatpush1.bf16.msra.mxu0 0
        %1865 = vmatprep.subr.bf16.mxu0 0
        %1866 = vmatpush1.bf16.msra.mxu0 0
        %1867 = vmatprep.subr.bf16.mxu0 0
        %1868 = vmatpush1.bf16.msra.mxu0 0
        %1869 = vmatprep.subr.bf16.mxu0 0
        %1870 = vmatpush1.bf16.msra.mxu0 0
        %1871 = vmatprep.subr.bf16.mxu0 0
        %1872 = vmatpush1.bf16.msra.mxu0 0
        %1873 = vmatprep.subr.bf16.mxu0 0
        %1874 = vmatpush1.bf16.msra.mxu0 0
        %1875 = vmatprep.subr.bf16.mxu0 0
        %1876 = vmatpush1.bf16.msra.mxu0 0
        %1877 = vmatprep.subr.bf16.mxu0 0
        %1878 = vmatpush1.bf16.msra.mxu0 0
        %1879 = vmatprep.subr.bf16.mxu0 0
        %1880 = vmatpush1.bf16.msra.mxu0 0
        %1881 = vmatprep.mubr.bf16.mxu0 0
        %1882 = vmatmul.mubr.bf16.gmra.mrb[0].mxu0 %v1788
        %v1883 = vpop.f32.mrb[0].mxu0
        %v1884 = vadd.f32 0.0, %v1883
        %v1885 = vpop.f32.mrb[0].mxu0
        %v1886 = vadd.f32 0.0, %v1885
        %v1887 = vpop.f32.mrb[0].mxu0
        %v1888 = vpop.f32.mrb[0].mxu0
        %1889 = vdwg.mxu0
        %1890 = vmatprep.subr.bf16.mxu0 %v1806
        %1891 = vmatpush1.bf16.msra.mxu0 %v1803
        %1892 = vmatprep.subr.bf16.mxu0 0
        %1893 = vmatpush1.bf16.msra.mxu0 0
        %1894 = vmatprep.subr.bf16.mxu0 0
        %1895 = vmatpush1.bf16.msra.mxu0 0
        %1896 = vmatprep.subr.bf16.mxu0 0
        %1897 = vmatpush1.bf16.msra.mxu0 0
        %1898 = vmatprep.subr.bf16.mxu0 0
        %1899 = vmatpush1.bf16.msra.mxu0 0
        %1900 = vmatprep.subr.bf16.mxu0 0
        %1901 = vmatpush1.bf16.msra.mxu0 0
        %1902 = vmatprep.subr.bf16.mxu0 0
        %1903 = vmatpush1.bf16.msra.mxu0 0
        %1904 = vmatprep.subr.bf16.mxu0 0
        %1905 = vmatpush1.bf16.msra.mxu0 0
        %1906 = vmatprep.subr.bf16.mxu0 0
        %1907 = vmatpush1.bf16.msra.mxu0 0
        %1908 = vmatprep.subr.bf16.mxu0 0
        %1909 = vmatpush1.bf16.msra.mxu0 0
        %1910 = vmatprep.subr.bf16.mxu0 0
        %1911 = vmatpush1.bf16.msra.mxu0 0
        %1912 = vmatprep.subr.bf16.mxu0 0
        %1913 = vmatpush1.bf16.msra.mxu0 0
        %1914 = vmatprep.subr.bf16.mxu0 0
        %1915 = vmatpush1.bf16.msra.mxu0 0
        %1916 = vmatprep.subr.bf16.mxu0 0
        %1917 = vmatpush1.bf16.msra.mxu0 0
        %1918 = vmatprep.subr.bf16.mxu0 0
        %1919 = vmatpush1.bf16.msra.mxu0 0
        %1920 = vmatprep.subr.bf16.mxu0 0
        %1921 = vmatpush1.bf16.msra.mxu0 0
        %1922 = vmatprep.mubr.bf16.mxu0 0
        %1923 = vmatmul.mubr.bf16.gmra.mrb[0].mxu0 %v1788
        %v1924 = vpop.f32.mrb[0].mxu0
        %v1925 = vadd.f32 0.0, %v1924
        %v1926 = vpop.f32.mrb[0].mxu0
        %v1927 = vadd.f32 0.0, %v1926
        %v1928 = vpop.f32.mrb[0].mxu0
        %v1929 = vpop.f32.mrb[0].mxu0
        %1930 = vdwg.mxu0
        %v1931 = vadd.f32 %v1758, %v1843
        %v1932 = vadd.f32 %v1759, %v1845
        %v1933 = vadd.f32 %v1760, %v1884
        %v1934 = vadd.f32 %v1761, %v1886
        %v1935 = vadd.f32 %v1762, %v1925
        %v1936 = vadd.f32 %v1763, %v1927
        %s1937 = smul.u32 %s23, 6
        %s1938 = smul.addr %s1937, 8
        %s1939 = scalar_lea.vmem [#allocation2], %s1938
        %1940 = vst [vmem:[%s1939] sm:$0xff] %v1931
        %1941 = vst [vmem:[%s1939 + $0x8] sm:$0xff] %v1932
        %1942 = vst [vmem:[%s1939 + $0x10] sm:$0xff] %v1933
        %1943 = vst [vmem:[%s1939 + $0x18] sm:$0xff] %v1934
        %1944 = vst [vmem:[%s1939 + $0x20] sm:$0xff] %v1935
        %1945 = vst [vmem:[%s1939 + $0x28] sm:$0xff] %v1936
        %v1946 = vld [vmem:[%s344] sm:$0x3f]
        %v1948 = vlaneseq
        %v1949 = vshrl.u32 %v1948, 7
        %v1950 = vsub.s32 0, %v1949
        %v1951 = vrot.slane %v1946, %v1950
        %v1952 = vlaneseq
        %v1953 = vshrl.u32 %v1952, 7
        %v1954 = vsub.s32 1, %v1953
        %v1955 = vrot.slane %v1946, %v1954
        %v1956 = vlaneseq
        %v1957 = vshrl.u32 %v1956, 7
        %v1958 = vsub.s32 2, %v1957
        %v1959 = vrot.slane %v1946, %v1958
        %v1960 = vlaneseq
        %v1961 = vshrl.u32 %v1960, 7
        %v1962 = vsub.s32 3, %v1961
        %v1963 = vrot.slane %v1946, %v1962
        %v1964 = vlaneseq
        %v1965 = vshrl.u32 %v1964, 7
        %v1966 = vsub.s32 4, %v1965
        %v1967 = vrot.slane %v1946, %v1966
        %v1968 = vlaneseq
        %v1969 = vshrl.u32 %v1968, 7
        %v1970 = vsub.s32 5, %v1969
        %v1971 = vrot.slane %v1946, %v1970
        %vm1978 = vcmask 1040384
        %v1979 = vsel %vm1978, %v1951, 0.0
        %v1980 = vsel %vm1978, %v1955, 0.0
        %v1981 = vadd.f32 %v1979, %v1980
        %v1982 = vsel %vm1978, %v1959, 0.0
        %v1983 = vadd.f32 %v1981, %v1982
        %v1984 = vsel %vm1978, %v1963, 0.0
        %v1985 = vadd.f32 %v1983, %v1984
        %v1986 = vsel %vm1978, %v1967, 0.0
        %v1987 = vadd.f32 %v1985, %v1986
        %v1988 = vsel %vm1978, %v1971, 0.0
        %v1989 = vadd.f32 %v1987, %v1988
        %1990 = vadd.xlane.f32.xlu0 %v1989
        %v1991 = vpop.xlane.xlu0 %1990
        %v1992 = vmul.f32 %v1931, %v1951
        %v1993 = vmul.f32 %v1932, %v1955
        %v1994 = vmul.f32 %v1933, %v1959
        %v1995 = vmul.f32 %v1934, %v1963
        %v1996 = vmul.f32 %v1935, %v1967
        %v1997 = vmul.f32 %v1936, %v1971
        %v1998 = vadd.f32 %v1992, %v1993
        %v1999 = vadd.f32 %v1998, %v1994
        %v2000 = vadd.f32 %v1999, %v1995
        %v2001 = vadd.f32 %v2000, %v1996
        %v2002 = vadd.f32 %v2001, %v1997
        %2003 = vadd.xlane.f32.xlu0 %v2002
        %v2004 = vpop.xlane.xlu0 %2003
        %v2005 = vmax.f32 %v1991, 1.0
        %v2006 = vlaneseq
        %v2007 = vshrl.u32 %v2006, 7
        %v2008 = vsub.s32 0, %v2007
        %v2009 = vrot.slane %v2005, %v2008
        %v2010 = vrcp.pop %v2009
        %v2011 = vmul.f32 %v2004, %v2010
        %v2012 = vsub.f32 %v1931, %v2011
        %v2013 = vsub.f32 %v1932, %v2011
        %v2014 = vsub.f32 %v1933, %v2011
        %v2015 = vsub.f32 %v1934, %v2011
        %v2016 = vsub.f32 %v1935, %v2011
        %v2017 = vsub.f32 %v1936, %v2011
        %v2018 = vmul.f32 %v2012, %v1951
        %v2019 = vmul.f32 %v2013, %v1955
        %v2020 = vmul.f32 %v2014, %v1959
        %v2021 = vmul.f32 %v2015, %v1963
        %v2022 = vmul.f32 %v2016, %v1967
        %v2023 = vmul.f32 %v2017, %v1971
        %v2024 = vmul.f32 %v2018, %v2018
        %v2025 = vmul.f32 %v2019, %v2019
        %v2026 = vmul.f32 %v2020, %v2020
        %v2027 = vmul.f32 %v2021, %v2021
        %v2028 = vmul.f32 %v2022, %v2022
        %v2029 = vmul.f32 %v2023, %v2023
        %v2030 = vadd.f32 %v2024, %v2025
        %v2031 = vadd.f32 %v2030, %v2026
        %v2032 = vadd.f32 %v2031, %v2027
        %v2033 = vadd.f32 %v2032, %v2028
        %v2034 = vadd.f32 %v2033, %v2029
        %2035 = vadd.xlane.f32.xlu0 %v2034
        %v2036 = vpop.xlane.xlu0 %2035
        %v2037 = vld [vmem:[#allocation5] sm:$0x1]
        %v2038 = vadd.f32 %v2037, %v1991
        %v2039 = vmax.f32 %v2038, 1.0
        %v2040 = vrcp.pop %v2039
        %v2041 = vmul.f32 %v1991, %v2040
        %v2042 = vld [vmem:[#allocation3] sm:$0xff]
        %v2043 = vsub.f32 %v2011, %v2042
        %v2044 = vlaneseq
        %v2045 = vshrl.u32 %v2044, 7
        %v2046 = vsub.s32 0, %v2045
        %v2047 = vrot.slane %v2041, %v2046
        %v2048 = vmul.f32 %v2043, %v2047
        %v2049 = vadd.f32 %v2042, %v2048
        %vm2050 = vcmask 7168
        %2051 = vst.msk [vmem:[#allocation3] sm:$0xff] %vm2050, %v2049
        %v2052 = vld [vmem:[#allocation4] sm:$0xff]
        %v2053 = vadd.f32 %v2052, %v2036
        %v2054 = vmul.f32 %v2043, %v2043
        %v2055 = vmul.f32 %v2037, %v2041
        %v2057 = vlaneseq
        %v2058 = vshrl.u32 %v2057, 7
        %v2059 = vsub.s32 0, %v2058
        %v2060 = vrot.slane %v2055, %v2059
        %v2062 = vmul.f32 %v2054, %v2060
        %v2063 = vadd.f32 %v2053, %v2062
        %2064 = vst.msk [vmem:[#allocation4] sm:$0xff] %vm2050, %v2063
        %vm2065 = vcmask 0
        %2066 = vst.msk [vmem:[#allocation5] sm:$0x1] %vm2065, %v2038
      $region48: #{conv_bn_forward.1} parent=39 // pred_fallthru
        _
      %p2067 = scmp.eq.s32.totalorder %s22, 1
      %p2068 = pnand %p2067, %p362
      %p2069 = pneg %p2068
      // Predicated region
      $region49: #{conv_bn_forward.1} parent=39 // pred_check
        _
      $region50: #{conv_bn_forward.1} parent=39 // pred_check_branch
        %2071 = sbr.rel (%p2068) target = $region52
      $region51: #{conv_bn_forward.1} parent=39 // pred_region
        %v2072 = vld [vmem:[#allocation4] sm:$0xff]
        %v2073 = vmul.f32 %v2072, 0.001953125
        %v2074 = vld [vmem:[%s334] sm:$0xff]
        %v2075 = vadd.f32 %v2073, 1e-05
        %v2076 = vrsqrt.pop %v2075
        %v2077 = vmul.f32 %v2074, %v2076
        %vm2078 = vcmask 7168
        %2079 = vst.msk [vmem:[#allocation6] sm:$0xff] %vm2078, %v2077
        %v2080 = vld [vmem:[%s338] sm:$0xff]
        %v2081 = vld [vmem:[#allocation3] sm:$0xff]
        %v2082 = vmul.f32 %v2081, %v2077
        %v2083 = vsub.f32 %v2080, %v2082
        %2084 = vst.msk [vmem:[#allocation7] sm:$0xff] %vm2078, %v2083
      $region52: #{conv_bn_forward.1} parent=39 // pred_fallthru
        _
      // Predicated region
      $region53: #{conv_bn_forward.1} parent=39 // pred_check
        %p2085 = pneg %p2067
      $region54: #{conv_bn_forward.1} parent=39 // pred_check_branch
        %2087 = sbr.rel (%p2085) target = $region56
      $region55: #{conv_bn_forward.1} parent=39 // pred_region
        %s2088 = smul.u32 %s23, 6
        %s2089 = smul.addr %s2088, 8
        %s2090 = scalar_lea.vmem [#allocation2], %s2089
        %v2091 = vld [vmem:[%s2090] sm:$0xff]
        %v2092 = vld [vmem:[%s2090 + $0x8] sm:$0xff]
        %v2093 = vld [vmem:[%s2090 + $0x10] sm:$0xff]
        %v2094 = vld [vmem:[%s2090 + $0x18] sm:$0xff]
        %v2095 = vld [vmem:[%s2090 + $0x20] sm:$0xff]
        %v2096 = vld [vmem:[%s2090 + $0x28] sm:$0xff]
        %v2097 = vld [vmem:[#allocation6] sm:$0xff]
        %2099 = vset.pattern.permute.xlu0 0
        %2100 = vperm.xlu0 %2099, %v2097
        %v2101 = vpop.permute.xlu0 %2100
        %v2103 = vmul.f32 %v2091, %v2101
        %v2104 = vmul.f32 %v2092, %v2101
        %v2105 = vmul.f32 %v2093, %v2101
        %v2106 = vmul.f32 %v2094, %v2101
        %v2107 = vmul.f32 %v2095, %v2101
        %v2108 = vmul.f32 %v2096, %v2101
        %v2109 = vld [vmem:[#allocation7] sm:$0xff]
        %2111 = vset.pattern.permute.xlu0 0
        %2112 = vperm.xlu0 %2111, %v2109
        %v2113 = vpop.permute.xlu0 %2112
        %v2115 = vadd.f32 %v2103, %v2113
        %v2116 = vadd.f32 %v2104, %v2113
        %v2117 = vadd.f32 %v2105, %v2113
        %v2118 = vadd.f32 %v2106, %v2113
        %v2119 = vadd.f32 %v2107, %v2113
        %v2120 = vadd.f32 %v2108, %v2113
        %2121 = vst [vmem:[%s357] sm:$0xff] %v2115
        %2122 = vst [vmem:[%s357 + $0x8] sm:$0xff] %v2116
        %2123 = vst [vmem:[%s357 + $0x10] sm:$0xff] %v2117
        %2124 = vst [vmem:[%s357 + $0x18] sm:$0xff] %v2118
        %2125 = vst [vmem:[%s357 + $0x20] sm:$0xff] %v2119
        %2126 = vst [vmem:[%s357 + $0x28] sm:$0xff] %v2120
      $region56: #{conv_bn_forward.1} parent=39 // pred_fallthru
        _
      %s2127 = smul.u32 %s22, %s23
      %s2128 = smul.u32 6, %s2127
      %p2129 = scmp.lt.s32.totalorder %s21, 0
      %s2130 = scalar_select %p2129, %s21, 0
      %p2131 = scmp.lt.s32.totalorder %s2128, 5
      %s2132 = scalar_select %p2131, %s2128, 5
      %s2133 = smul.addr %s2130, 6
      %s2134 = sadd.s32 %s2132, %s2133
      %s2135 = smul.addr %s2134, 8
      %s2136 = scalar_lea.vmem %s5, %s2135
      // Predicated region
      $region57: #{conv_bn_forward.1} parent=39 // pred_check
        %p2137 = pneg %p195
      $region58: #{conv_bn_forward.1} parent=39 // pred_check_branch
        %2139 = sbr.rel (%p2137) target = $region60
      $region59: #{conv_bn_forward.1} parent=39 // pred_region
        %s2140 = smul.u32 %s22, %s23
        %s2141 = smul.u32 6, %s2140
      $region60: #{conv_bn_forward.1} parent=39 // pred_fallthru
        _
    $region40: #{conv_bn_forward.1} parent=5 // pred_fallthru
      _
    %p2142 = scmp.le.s32.totalorder 2, %s11
    // Predicated region
    $region61: #{conv_bn_forward.1} parent=5 // pred_check
      %p2143 = pneg %p2142
    $region62: #{conv_bn_forward.1} parent=5 // pred_check_branch
      %2145 = sbr.rel (%p2143) target = $region64
    $region63: #{conv_bn_forward.1} parent=5 // pred_region
      %s2146 = ssub.s32 %s11, 2
      // Predicated region
      $region65: #{conv_bn_forward.1} parent=63 // pred_check
        %p2147 = pneg %p201
      $region66: #{conv_bn_forward.1} parent=63 // pred_check_branch
        %2149 = sbr.rel (%p2147) target = $region68
      $region67: #{conv_bn_forward.1} parent=63 // pred_region
        %s2150 = smul.u32 %s25, %s26
        %s2151 = smul.u32 6, %s2150
        %p2152 = scmp.lt.s32.totalorder %s24, 0
        %s2153 = scalar_select %p2152, %s24, 0
        %p2154 = scmp.lt.s32.totalorder %s2151, 5
        %s2155 = scalar_select %p2154, %s2151, 5
        %s2156 = smul.addr %s2153, 6
        %s2157 = sadd.s32 %s2155, %s2156
        %s2158 = smul.addr %s2157, 8
        %s2159 = scalar_lea.vmem %s5, %s2158
      $region68: #{conv_bn_forward.1} parent=63 // pred_fallthru
        _
    $region64: #{conv_bn_forward.1} parent=5 // pred_fallthru
      _
  $region6: #{conv_bn_forward.1} parent=0 // loop_footer
    %s15 = sadd.s32 1, %s11
  $region7: #{conv_bn_forward.1} parent=0 // loop_footer_branch
    %10 = sbr.rel target = $region3
  $region8: #{conv_bn_forward.1} parent=0 // loop_exit
    _

</llo_original>
